<compile_context>
chip_gen: v7x
topology: tpu7x:2x2x1
jax: 0.10.0
libtpu: 0.0.40
codegen_flags: <defaults>
</compile_context>

<pallas_src>
import functools
import math

import jax
import jax.numpy as jnp
from jax.experimental import pallas as pl
from jax.experimental.pallas import tpu as pltpu


def _round_up(x, m):
    return (x + m - 1) // m * m


def _masked_layer_norm(x, gamma, beta, n_real, eps=1e-5):
    """LayerNorm over the last dim; only the first `n_real` lanes are real
    features.  Padded lanes of `x`, `gamma`, `beta` are zero by construction."""
    e_pad = x.shape[-1]
    mu = jnp.sum(x, axis=-1, keepdims=True) * (1.0 / n_real)
    diff = x - mu
    if e_pad != n_real:
        lane = jax.lax.broadcasted_iota(jnp.int32, x.shape, x.ndim - 1)
        diff = jnp.where(lane < n_real, diff, 0.0)
    var = jnp.sum(diff * diff, axis=-1, keepdims=True) * (1.0 / n_real)
    return diff * jax.lax.rsqrt(var + eps) * gamma + beta


def _encoder_layer_kernel(nhead, d_model,
                          src_ref, pos_ref,
                          wqk_ref, bqk_ref, wv_ref, bv_ref,
                          wo_ref, bo_ref,
                          w1_ref, b1_ref, w2_ref, b2_ref,
                          g1_ref, be1_ref, g2_ref, be2_ref,
                          out_ref):
    f32, bf16 = jnp.float32, jnp.bfloat16
    src = src_ref[0]                                   # (S, E_pad)  f32
    S, E_pad = src.shape
    H = nhead
    Dh = d_model // nhead

    # q = k = with_pos_embed(src, pos); value = src.  pos arrives as bf16 (it
    # only feeds the bf16 Q/K matmul); the sum is done in f32, cast once.
    q_in = (src + pos_ref[0].astype(f32)).astype(bf16)
    src_bf = src.astype(bf16)

    # Fused Q/K projection as one wide matmul; V projection as one wide matmul.
    # The 1/sqrt(Dh) scale is already folded into the Q weights/bias.
    qk = jnp.dot(q_in, wqk_ref[...],
                 preferred_element_type=f32) + bqk_ref[...]        # (S, 2*E_pad)
    v_full = jnp.dot(src_bf, wv_ref[...],
                     preferred_element_type=f32) + bv_ref[...]     # (S, E_pad)

    # Per-head attention on static lane slices of the wide projections.  Each
    # head's output goes straight through its slice of the output projection
    # and is accumulated, so no (H, S, E_pad) intermediate is materialized.
    attn = jnp.zeros((S, E_pad), f32)
    for h in range(H):
        lo = h * Dh
        qh = qk[:, lo:lo + Dh].astype(bf16)                        # (S, Dh)
        kh = qk[:, E_pad + lo:E_pad + lo + Dh].astype(bf16)        # (S, Dh)
        vh = v_full[:, lo:lo + Dh].astype(bf16)                    # (S, Dh)

        s = jax.lax.dot_general(qh, kh, (((1,), (1,)), ((), ())),
                                preferred_element_type=f32)        # (S, S) = q @ k.T
        s = s - jnp.max(s, axis=-1, keepdims=True)
        p = jnp.exp(s)                                             # unnormalized probs
        l = jnp.sum(p, axis=-1, keepdims=True)                     # (S, 1)
        o = jnp.dot(p.astype(bf16), vh, preferred_element_type=f32)
        o = o * (1.0 / l)                                          # deferred softmax norm
        attn = attn + jnp.dot(o.astype(bf16), wo_ref[h],
                              preferred_element_type=f32)          # (S, E_pad)

    # Residual + norm1   (dropout1 identity at inference)
    x = src + attn + bo_ref[...]
    x = _masked_layer_norm(x, g1_ref[...], be1_ref[...], d_model)

    # FFN: linear1 -> relu -> linear2   (dropout identity); h1 kept bf16.
    h1 = jnp.dot(x.astype(bf16), w1_ref[...],
                 preferred_element_type=f32) + b1_ref[...]         # (S, F_pad)
    h1 = jnp.maximum(h1, 0.0).astype(bf16)
    h2 = jnp.dot(h1, w2_ref[...],
                 preferred_element_type=f32) + b2_ref[...]         # (S, E_pad)

    # Residual + norm2   (dropout2 identity)
    x = x + h2
    x = _masked_layer_norm(x, g2_ref[...], be2_ref[...], d_model)

    out_ref[0] = x.astype(out_ref.dtype)


def prepare_encoder_params(params, nhead):
    """One-time weight preprocessing (hoisted out of the per-call forward):
    pre-transpose, zero-pad to lane multiples, fold 1/sqrt(Dh) into Wq/bq,
    split Wo per head, cast all MXU operands to bf16."""
    E = params["wq"].shape[0]
    F = params["w1"].shape[0]
    assert E % nhead == 0
    Dh = E // nhead
    E_pad = _round_up(E, 128)
    F_pad = _round_up(F, 128)
    scale = 1.0 / math.sqrt(Dh)
    f32, bf16 = jnp.float32, jnp.bfloat16

    def pad2(w, rows, cols):
        return jnp.pad(w, ((0, rows - w.shape[0]), (0, cols - w.shape[1])))

    def pad_row(v, cols):                       # (1, n) -> (1, cols)
        return jnp.pad(v, ((0, 0), (0, cols - v.shape[1])))

    # Fused QK weight: Q half in columns [0, E), K half starting at the
    # 128-aligned offset E_pad, scale folded into Q.
    wqk = jnp.concatenate([pad2(params["wq"].T * scale, E_pad, E_pad),
                           pad2(params["wk"].T, E_pad, E_pad)],
                          axis=1).astype(bf16)                        # (E_pad, 2*E_pad)
    bqk = jnp.concatenate([pad_row(params["bq"] * scale, E_pad),
                           pad_row(params["bk"], E_pad)],
                          axis=1).astype(f32)                         # (1, 2*E_pad)

    wv = pad2(params["wv"].T, E_pad, E_pad).astype(bf16)              # (E_pad, E_pad)
    bv = pad_row(params["bv"], E_pad).astype(f32)

    wo = pad2(params["wo"].T, E, E_pad).reshape(nhead, Dh, E_pad).astype(bf16)  # (H,Dh,E_pad)
    bo = pad_row(params["bo"], E_pad).astype(f32)

    w1 = pad2(params["w1"].T, E_pad, F_pad).astype(bf16)              # (E_pad, F_pad)
    b1 = pad_row(params["b1"], F_pad).astype(f32)
    w2 = pad2(params["w2"].T, F_pad, E_pad).astype(bf16)              # (F_pad, E_pad)
    b2 = pad_row(params["b2"], E_pad).astype(f32)

    g1 = pad_row(params["g1"], E_pad).astype(f32)
    be1 = pad_row(params["be1"], E_pad).astype(f32)
    g2 = pad_row(params["g2"], E_pad).astype(f32)
    be2 = pad_row(params["be2"], E_pad).astype(f32)

    weights = (wqk, bqk, wv, bv, wo, bo, w1, b1, w2, b2, g1, be1, g2, be2)
    return {"weights": weights, "d_model": E, "dim_ff": F}


def transformer_encoder_layer(src, pos, prepped, nhead):
    """src, pos: (S, N, E) as in PyTorch nn.MultiheadAttention.  Returns (S, N, E).
    `prepped` comes from prepare_encoder_params (weight prep runs once)."""
    S, N, E = src.shape
    assert prepped["d_model"] == E and E % nhead == 0
    F = prepped["dim_ff"]
    E_pad = _round_up(E, 128)
    F_pad = _round_up(F, 128)
    f32, bf16 = jnp.float32, jnp.bfloat16
    weights = prepped["weights"]

    # Activations: (S, N, E) -> (N, S, E_pad), zero-padded feature lanes.
    def prep_act(a, dtype):
        a = jnp.transpose(a, (1, 0, 2)).astype(dtype)
        if E_pad != E:
            a = jnp.pad(a, ((0, 0), (0, 0), (0, E_pad - E)))
        return a

    src_b = prep_act(src, f32)          # residual path needs f32
    pos_b = prep_act(pos, bf16)         # pos only feeds the bf16 Q/K path

    operands = (src_b, pos_b) + tuple(weights)

    def act_spec():
        return pl.BlockSpec((1, S, E_pad), lambda n: (n, 0, 0))

    def full_spec(shape):
        nd = len(shape)
        # Constant index_map: weights/biases stay resident across grid steps.
        return pl.BlockSpec(shape, lambda n: (0,) * nd)

    in_specs = [act_spec(), act_spec()] + [full_spec(w.shape) for w in weights]

    # Generation-aware VMEM budget: double-buffered activation blocks, resident
    # weights (x2: default double-buffering), and headroom for the per-head
    # score tensors + FFN intermediates.  Capped at physical VMEM - 16 MiB.
    weight_bytes = sum(int(w.size) * w.dtype.itemsize for w in weights)
    act_block_bytes = S * E_pad * (4 + 2 + 4)           # src f32 + pos bf16 + out f32
    interm_bytes = 4 * (nhead * S * S + 2 * S * F_pad + 2 * S * (2 * E_pad)
                        + 8 * S * E_pad)
    est = 2 * act_block_bytes + 2 * weight_bytes + interm_bytes
    try:
        cap = int(pltpu.get_tpu_info().vmem_capacity_bytes)
    except Exception:
        cap = 64 * 1024 * 1024
    vmem_limit = int(max(min(est, cap - 16 * 1024 * 1024), 8 * 1024 * 1024))

    out = pl.pallas_call(
        functools.partial(_encoder_layer_kernel, nhead, E),
        out_shape=jax.ShapeDtypeStruct((N, S, E_pad), src.dtype),
        grid=(N,),
        in_specs=in_specs,
        out_specs=pl.BlockSpec((1, S, E_pad), lambda n: (n, 0, 0)),
        compiler_params=pltpu.CompilerParams(
            dimension_semantics=("parallel",),
            vmem_limit_bytes=vmem_limit),
    )(*operands)

    return jnp.transpose(out[:, :, :E], (1, 0, 2))      # back to (S, N, E)


def _reference(src, pos, params, nhead):
    """Pure-JAX f32 reference of the same forward (post-norm, relu, eval mode)."""
    S, N, E = src.shape
    Dh = E // nhead
    scale = 1.0 / math.sqrt(Dh)
    x = src.astype(jnp.float32)
    p = pos.astype(jnp.float32)

    def ln(y, g, b, eps=1e-5):
        mu = jnp.mean(y, -1, keepdims=True)
        var = jnp.mean((y - mu) ** 2, -1, keepdims=True)
        return (y - mu) / jnp.sqrt(var + eps) * g + b

    qk_in = x + p
    q = qk_in @ params["wq"].T + params["bq"][0]
    k = qk_in @ params["wk"].T + params["bk"][0]
    v = x @ params["wv"].T + params["bv"][0]
    qh = q.reshape(S, N, nhead, Dh).transpose(1, 2, 0, 3) * scale
    kh = k.reshape(S, N, nhead, Dh).transpose(1, 2, 0, 3)
    vh = v.reshape(S, N, nhead, Dh).transpose(1, 2, 0, 3)
    sc = jnp.einsum("nhqd,nhkd->nhqk", qh, kh)
    pr = jax.nn.softmax(sc, axis=-1)
    o = jnp.einsum("nhqk,nhkd->nhqd", pr, vh)
    o = o.transpose(2, 0, 1, 3).reshape(S, N, E)
    o = o @ params["wo"].T + params["bo"][0]
    x = ln(x + o, params["g1"][0], params["be1"][0])
    ff = jnp.maximum(x @ params["w1"].T + params["b1"][0], 0.0) @ params["w2"].T + params["b2"][0]
    x = ln(x + ff, params["g2"][0], params["be2"][0])
    return x


if __name__ == "__main__":
    S, N, E, H, F = 16, 2, 64, 4, 128   # seq, batch, d_model, nhead, dim_feedforward

    key = jax.random.PRNGKey(0)
    ks = jax.random.split(key, 14)

    def init(k, shape, scale=0.1):
        return (scale * jax.random.normal(k, shape)).astype(jnp.float32)

    params = {
        "wq": init(ks[0], (E, E)), "wk": init(ks[1], (E, E)), "wv": init(ks[2], (E, E)),
        "bq": init(ks[3], (1, E)), "bk": init(ks[4], (1, E)), "bv": init(ks[5], (1, E)),
        "wo": init(ks[6], (E, E)), "bo": init(ks[7], (1, E)),
        "w1": init(ks[8], (F, E)), "b1": init(ks[9], (1, F)),
        "w2": init(ks[10], (E, F)), "b2": init(ks[11], (1, E)),
        "g1": jnp.ones((1, E), jnp.float32), "be1": jnp.zeros((1, E), jnp.float32),
        "g2": jnp.ones((1, E), jnp.float32), "be2": jnp.zeros((1, E), jnp.float32),
    }

    src = jax.random.normal(ks[12], (S, N, E), jnp.float32)
    pos = jax.random.normal(ks[13], (S, N, E), jnp.float32)

    prepped = prepare_encoder_params(params, H)     # one-time weight prep (hoisted)
    out = transformer_encoder_layer(src, pos, prepped, H)
    out = jax.block_until_ready(out)

    ref = _reference(src, pos, params, H)
    assert out.shape == (S, N, E)
    # bf16 MXU operands -> compare against f32 reference with bf16 tolerance.
    assert jnp.allclose(out, ref, rtol=3e-2, atol=3e-2), "mismatch vs reference"

    print("KERNEL_OK")
</pallas_src>

<mosaic_0001>
module attributes {stable_mosaic.version = 11 : i64} {
  func.func @_encoder_layer_kernel(%arg0: i32, %arg1: memref<1x16x128xf32, #tpu.memory_space<vmem>>, %arg2: memref<1x16x128xbf16, #tpu.memory_space<vmem>>, %arg3: memref<128x256xbf16, #tpu.memory_space<vmem>>, %arg4: memref<1x256xf32, #tpu.memory_space<vmem>>, %arg5: memref<128x128xbf16, #tpu.memory_space<vmem>>, %arg6: memref<1x128xf32, #tpu.memory_space<vmem>>, %arg7: memref<4x16x128xbf16, #tpu.memory_space<vmem>>, %arg8: memref<1x128xf32, #tpu.memory_space<vmem>>, %arg9: memref<128x128xbf16, #tpu.memory_space<vmem>>, %arg10: memref<1x128xf32, #tpu.memory_space<vmem>>, %arg11: memref<128x128xbf16, #tpu.memory_space<vmem>>, %arg12: memref<1x128xf32, #tpu.memory_space<vmem>>, %arg13: memref<1x128xf32, #tpu.memory_space<vmem>>, %arg14: memref<1x128xf32, #tpu.memory_space<vmem>>, %arg15: memref<1x128xf32, #tpu.memory_space<vmem>>, %arg16: memref<1x128xf32, #tpu.memory_space<vmem>>, %arg17: memref<1x16x128xf32, #tpu.memory_space<vmem>>) attributes {dimension_semantics = [#tpu.dimension_semantics<parallel>], iteration_bounds = array<i64: 2>, scalar_prefetch = 0 : i64, scratch_operands = 0 : i64, tpu.core_type = #tpu.core_type<tc>, window_params = [{transform_indices = @transform_0, window_bounds = array<i64: 1, 16, 128>}, {transform_indices = @transform_1, window_bounds = array<i64: 1, 16, 128>}, {pipeline_mode = #tpu.pipeline_mode<synchronous>, transform_indices = @transform_2, window_bounds = array<i64: 128, 256>}, {pipeline_mode = #tpu.pipeline_mode<synchronous>, transform_indices = @transform_3, window_bounds = array<i64: 1, 256>}, {pipeline_mode = #tpu.pipeline_mode<synchronous>, transform_indices = @transform_4, window_bounds = array<i64: 128, 128>}, {pipeline_mode = #tpu.pipeline_mode<synchronous>, transform_indices = @transform_5, window_bounds = array<i64: 1, 128>}, {pipeline_mode = #tpu.pipeline_mode<synchronous>, transform_indices = @transform_6, window_bounds = array<i64: 4, 16, 128>}, {pipeline_mode = #tpu.pipeline_mode<synchronous>, transform_indices = @transform_7, window_bounds = array<i64: 1, 128>}, {pipeline_mode = #tpu.pipeline_mode<synchronous>, transform_indices = @transform_8, window_bounds = array<i64: 128, 128>}, {pipeline_mode = #tpu.pipeline_mode<synchronous>, transform_indices = @transform_9, window_bounds = array<i64: 1, 128>}, {pipeline_mode = #tpu.pipeline_mode<synchronous>, transform_indices = @transform_10, window_bounds = array<i64: 128, 128>}, {pipeline_mode = #tpu.pipeline_mode<synchronous>, transform_indices = @transform_11, window_bounds = array<i64: 1, 128>}, {pipeline_mode = #tpu.pipeline_mode<synchronous>, transform_indices = @transform_12, window_bounds = array<i64: 1, 128>}, {pipeline_mode = #tpu.pipeline_mode<synchronous>, transform_indices = @transform_13, window_bounds = array<i64: 1, 128>}, {pipeline_mode = #tpu.pipeline_mode<synchronous>, transform_indices = @transform_14, window_bounds = array<i64: 1, 128>}, {pipeline_mode = #tpu.pipeline_mode<synchronous>, transform_indices = @transform_15, window_bounds = array<i64: 1, 128>}, {transform_indices = @transform_16, window_bounds = array<i64: 1, 16, 128>}]} {
    %c0 = arith.constant 0 : index
    %c0_0 = arith.constant 0 : index
    %c0_1 = arith.constant 0 : index
    %0 = vector.load %arg1[%c0, %c0_0, %c0_1] : memref<1x16x128xf32, #tpu.memory_space<vmem>>, vector<1x16x128xf32>
    %1 = vector.shape_cast %0 : vector<1x16x128xf32> to vector<16x128xf32>
    %c0_2 = arith.constant 0 : index
    %c0_3 = arith.constant 0 : index
    %c0_4 = arith.constant 0 : index
    %2 = vector.load %arg2[%c0_2, %c0_3, %c0_4] : memref<1x16x128xbf16, #tpu.memory_space<vmem>>, vector<1x16x128xbf16>
    %3 = vector.shape_cast %2 : vector<1x16x128xbf16> to vector<16x128xbf16>
    %4 = arith.extf %3 : vector<16x128xbf16> to vector<16x128xf32>
    %5 = arith.addf %1, %4 : vector<16x128xf32>
    %6 = arith.truncf %5 : vector<16x128xf32> to vector<16x128xbf16>
    %7 = arith.truncf %1 : vector<16x128xf32> to vector<16x128xbf16>
    %c0_5 = arith.constant 0 : index
    %c0_6 = arith.constant 0 : index
    %8 = vector.load %arg3[%c0_5, %c0_6] : memref<128x256xbf16, #tpu.memory_space<vmem>>, vector<128x256xbf16>
    %cst = arith.constant dense<0.000000e+00> : vector<16x256xf32>
    %9 = tpu.matmul %6, %8, %cst {dimension_numbers = #tpu.dot_dimension_numbers<[1], [0], [0], [1], [0, 0, 1, 1], [], []>} : vector<16x128xbf16>, vector<128x256xbf16>, vector<16x256xf32> -> vector<16x256xf32>
    %c0_7 = arith.constant 0 : index
    %c0_8 = arith.constant 0 : index
    %10 = vector.load %arg4[%c0_7, %c0_8] : memref<1x256xf32, #tpu.memory_space<vmem>>, vector<1x256xf32>
    %11 = vector.broadcast %10 : vector<1x256xf32> to vector<16x256xf32>
    %12 = arith.addf %9, %11 : vector<16x256xf32>
    %c0_9 = arith.constant 0 : index
    %c0_10 = arith.constant 0 : index
    %13 = vector.load %arg5[%c0_9, %c0_10] : memref<128x128xbf16, #tpu.memory_space<vmem>>, vector<128x128xbf16>
    %cst_11 = arith.constant dense<0.000000e+00> : vector<16x128xf32>
    %14 = tpu.matmul %7, %13, %cst_11 {dimension_numbers = #tpu.dot_dimension_numbers<[1], [0], [0], [1], [0, 0, 1, 1], [], []>} : vector<16x128xbf16>, vector<128x128xbf16>, vector<16x128xf32> -> vector<16x128xf32>
    %c0_12 = arith.constant 0 : index
    %c0_13 = arith.constant 0 : index
    %15 = vector.load %arg6[%c0_12, %c0_13] : memref<1x128xf32, #tpu.memory_space<vmem>>, vector<1x128xf32>
    %16 = vector.broadcast %15 : vector<1x128xf32> to vector<16x128xf32>
    %17 = arith.addf %14, %16 : vector<16x128xf32>
    %cst_14 = arith.constant 0.000000e+00 : f32
    %18 = vector.broadcast %cst_14 : f32 to vector<16x128xf32>
    %19 = vector.extract_strided_slice %12 {offsets = [0, 0], sizes = [16, 16], strides = [1, 1]} : vector<16x256xf32> to vector<16x16xf32>
    %20 = arith.truncf %19 : vector<16x16xf32> to vector<16x16xbf16>
    %21 = vector.extract_strided_slice %12 {offsets = [0, 128], sizes = [16, 16], strides = [1, 1]} : vector<16x256xf32> to vector<16x16xf32>
    %22 = arith.truncf %21 : vector<16x16xf32> to vector<16x16xbf16>
    %23 = vector.extract_strided_slice %17 {offsets = [0, 0], sizes = [16, 16], strides = [1, 1]} : vector<16x128xf32> to vector<16x16xf32>
    %24 = arith.truncf %23 : vector<16x16xf32> to vector<16x16xbf16>
    %cst_15 = arith.constant dense<0.000000e+00> : vector<16x16xf32>
    %25 = tpu.matmul %20, %22, %cst_15 {dimension_numbers = #tpu.dot_dimension_numbers<[1], [1], [0], [0], [0, 0, 1, 0], [], []>} : vector<16x16xbf16>, vector<16x16xbf16>, vector<16x16xf32> -> vector<16x16xf32>
    %cst_16 = arith.constant dense<0xFF800000> : vector<16xf32>
    %26 = vector.multi_reduction <maximumf>, %25, %cst_16 [1] : vector<16x16xf32> to vector<16xf32>
    %27 = vector.shape_cast %26 : vector<16xf32> to vector<16x1xf32>
    %28 = vector.broadcast %27 : vector<16x1xf32> to vector<16x16xf32>
    %29 = arith.subf %25, %28 : vector<16x16xf32>
    %30 = math.exp %29 : vector<16x16xf32>
    %cst_17 = arith.constant dense<0.000000e+00> : vector<16xf32>
    %31 = vector.multi_reduction <add>, %30, %cst_17 [1] : vector<16x16xf32> to vector<16xf32>
    %32 = vector.shape_cast %31 : vector<16xf32> to vector<16x1xf32>
    %33 = arith.truncf %30 : vector<16x16xf32> to vector<16x16xbf16>
    %cst_18 = arith.constant dense<0.000000e+00> : vector<16x16xf32>
    %34 = tpu.matmul %33, %24, %cst_18 {dimension_numbers = #tpu.dot_dimension_numbers<[1], [0], [0], [1], [0, 0, 1, 1], [], []>} : vector<16x16xbf16>, vector<16x16xbf16>, vector<16x16xf32> -> vector<16x16xf32>
    %cst_19 = arith.constant 1.000000e+00 : f32
    %35 = vector.broadcast %cst_19 : f32 to vector<16x1xf32>
    %36 = arith.divf %35, %32 : vector<16x1xf32>
    %37 = vector.broadcast %36 : vector<16x1xf32> to vector<16x16xf32>
    %38 = arith.mulf %34, %37 : vector<16x16xf32>
    %39 = arith.truncf %38 : vector<16x16xf32> to vector<16x16xbf16>
    %c0_20 = arith.constant 0 : index
    %c0_21 = arith.constant 0 : index
    %c0_22 = arith.constant 0 : index
    %40 = vector.load %arg7[%c0_20, %c0_21, %c0_22] : memref<4x16x128xbf16, #tpu.memory_space<vmem>>, vector<1x16x128xbf16>
    %41 = vector.shape_cast %40 : vector<1x16x128xbf16> to vector<16x128xbf16>
    %cst_23 = arith.constant dense<0.000000e+00> : vector<16x128xf32>
    %42 = tpu.matmul %39, %41, %cst_23 {dimension_numbers = #tpu.dot_dimension_numbers<[1], [0], [0], [1], [0, 0, 1, 1], [], []>} : vector<16x16xbf16>, vector<16x128xbf16>, vector<16x128xf32> -> vector<16x128xf32>
    %43 = arith.addf %18, %42 : vector<16x128xf32>
    %44 = vector.extract_strided_slice %12 {offsets = [0, 16], sizes = [16, 16], strides = [1, 1]} : vector<16x256xf32> to vector<16x16xf32>
    %45 = arith.truncf %44 : vector<16x16xf32> to vector<16x16xbf16>
    %46 = vector.extract_strided_slice %12 {offsets = [0, 144], sizes = [16, 16], strides = [1, 1]} : vector<16x256xf32> to vector<16x16xf32>
    %47 = arith.truncf %46 : vector<16x16xf32> to vector<16x16xbf16>
    %48 = vector.extract_strided_slice %17 {offsets = [0, 16], sizes = [16, 16], strides = [1, 1]} : vector<16x128xf32> to vector<16x16xf32>
    %49 = arith.truncf %48 : vector<16x16xf32> to vector<16x16xbf16>
    %cst_24 = arith.constant dense<0.000000e+00> : vector<16x16xf32>
    %50 = tpu.matmul %45, %47, %cst_24 {dimension_numbers = #tpu.dot_dimension_numbers<[1], [1], [0], [0], [0, 0, 1, 0], [], []>} : vector<16x16xbf16>, vector<16x16xbf16>, vector<16x16xf32> -> vector<16x16xf32>
    %cst_25 = arith.constant dense<0xFF800000> : vector<16xf32>
    %51 = vector.multi_reduction <maximumf>, %50, %cst_25 [1] : vector<16x16xf32> to vector<16xf32>
    %52 = vector.shape_cast %51 : vector<16xf32> to vector<16x1xf32>
    %53 = vector.broadcast %52 : vector<16x1xf32> to vector<16x16xf32>
    %54 = arith.subf %50, %53 : vector<16x16xf32>
    %55 = math.exp %54 : vector<16x16xf32>
    %cst_26 = arith.constant dense<0.000000e+00> : vector<16xf32>
    %56 = vector.multi_reduction <add>, %55, %cst_26 [1] : vector<16x16xf32> to vector<16xf32>
    %57 = vector.shape_cast %56 : vector<16xf32> to vector<16x1xf32>
    %58 = arith.truncf %55 : vector<16x16xf32> to vector<16x16xbf16>
    %cst_27 = arith.constant dense<0.000000e+00> : vector<16x16xf32>
    %59 = tpu.matmul %58, %49, %cst_27 {dimension_numbers = #tpu.dot_dimension_numbers<[1], [0], [0], [1], [0, 0, 1, 1], [], []>} : vector<16x16xbf16>, vector<16x16xbf16>, vector<16x16xf32> -> vector<16x16xf32>
    %cst_28 = arith.constant 1.000000e+00 : f32
    %60 = vector.broadcast %cst_28 : f32 to vector<16x1xf32>
    %61 = arith.divf %60, %57 : vector<16x1xf32>
    %62 = vector.broadcast %61 : vector<16x1xf32> to vector<16x16xf32>
    %63 = arith.mulf %59, %62 : vector<16x16xf32>
    %64 = arith.truncf %63 : vector<16x16xf32> to vector<16x16xbf16>
    %c1 = arith.constant 1 : index
    %c0_29 = arith.constant 0 : index
    %c0_30 = arith.constant 0 : index
    %65 = vector.load %arg7[%c1, %c0_29, %c0_30] : memref<4x16x128xbf16, #tpu.memory_space<vmem>>, vector<1x16x128xbf16>
    %66 = vector.shape_cast %65 : vector<1x16x128xbf16> to vector<16x128xbf16>
    %cst_31 = arith.constant dense<0.000000e+00> : vector<16x128xf32>
    %67 = tpu.matmul %64, %66, %cst_31 {dimension_numbers = #tpu.dot_dimension_numbers<[1], [0], [0], [1], [0, 0, 1, 1], [], []>} : vector<16x16xbf16>, vector<16x128xbf16>, vector<16x128xf32> -> vector<16x128xf32>
    %68 = arith.addf %43, %67 : vector<16x128xf32>
    %69 = vector.extract_strided_slice %12 {offsets = [0, 32], sizes = [16, 16], strides = [1, 1]} : vector<16x256xf32> to vector<16x16xf32>
    %70 = arith.truncf %69 : vector<16x16xf32> to vector<16x16xbf16>
    %71 = vector.extract_strided_slice %12 {offsets = [0, 160], sizes = [16, 16], strides = [1, 1]} : vector<16x256xf32> to vector<16x16xf32>
    %72 = arith.truncf %71 : vector<16x16xf32> to vector<16x16xbf16>
    %73 = vector.extract_strided_slice %17 {offsets = [0, 32], sizes = [16, 16], strides = [1, 1]} : vector<16x128xf32> to vector<16x16xf32>
    %74 = arith.truncf %73 : vector<16x16xf32> to vector<16x16xbf16>
    %cst_32 = arith.constant dense<0.000000e+00> : vector<16x16xf32>
    %75 = tpu.matmul %70, %72, %cst_32 {dimension_numbers = #tpu.dot_dimension_numbers<[1], [1], [0], [0], [0, 0, 1, 0], [], []>} : vector<16x16xbf16>, vector<16x16xbf16>, vector<16x16xf32> -> vector<16x16xf32>
    %cst_33 = arith.constant dense<0xFF800000> : vector<16xf32>
    %76 = vector.multi_reduction <maximumf>, %75, %cst_33 [1] : vector<16x16xf32> to vector<16xf32>
    %77 = vector.shape_cast %76 : vector<16xf32> to vector<16x1xf32>
    %78 = vector.broadcast %77 : vector<16x1xf32> to vector<16x16xf32>
    %79 = arith.subf %75, %78 : vector<16x16xf32>
    %80 = math.exp %79 : vector<16x16xf32>
    %cst_34 = arith.constant dense<0.000000e+00> : vector<16xf32>
    %81 = vector.multi_reduction <add>, %80, %cst_34 [1] : vector<16x16xf32> to vector<16xf32>
    %82 = vector.shape_cast %81 : vector<16xf32> to vector<16x1xf32>
    %83 = arith.truncf %80 : vector<16x16xf32> to vector<16x16xbf16>
    %cst_35 = arith.constant dense<0.000000e+00> : vector<16x16xf32>
    %84 = tpu.matmul %83, %74, %cst_35 {dimension_numbers = #tpu.dot_dimension_numbers<[1], [0], [0], [1], [0, 0, 1, 1], [], []>} : vector<16x16xbf16>, vector<16x16xbf16>, vector<16x16xf32> -> vector<16x16xf32>
    %cst_36 = arith.constant 1.000000e+00 : f32
    %85 = vector.broadcast %cst_36 : f32 to vector<16x1xf32>
    %86 = arith.divf %85, %82 : vector<16x1xf32>
    %87 = vector.broadcast %86 : vector<16x1xf32> to vector<16x16xf32>
    %88 = arith.mulf %84, %87 : vector<16x16xf32>
    %89 = arith.truncf %88 : vector<16x16xf32> to vector<16x16xbf16>
    %c2 = arith.constant 2 : index
    %c0_37 = arith.constant 0 : index
    %c0_38 = arith.constant 0 : index
    %90 = vector.load %arg7[%c2, %c0_37, %c0_38] : memref<4x16x128xbf16, #tpu.memory_space<vmem>>, vector<1x16x128xbf16>
    %91 = vector.shape_cast %90 : vector<1x16x128xbf16> to vector<16x128xbf16>
    %cst_39 = arith.constant dense<0.000000e+00> : vector<16x128xf32>
    %92 = tpu.matmul %89, %91, %cst_39 {dimension_numbers = #tpu.dot_dimension_numbers<[1], [0], [0], [1], [0, 0, 1, 1], [], []>} : vector<16x16xbf16>, vector<16x128xbf16>, vector<16x128xf32> -> vector<16x128xf32>
    %93 = arith.addf %68, %92 : vector<16x128xf32>
    %94 = vector.extract_strided_slice %12 {offsets = [0, 48], sizes = [16, 16], strides = [1, 1]} : vector<16x256xf32> to vector<16x16xf32>
    %95 = arith.truncf %94 : vector<16x16xf32> to vector<16x16xbf16>
    %96 = vector.extract_strided_slice %12 {offsets = [0, 176], sizes = [16, 16], strides = [1, 1]} : vector<16x256xf32> to vector<16x16xf32>
    %97 = arith.truncf %96 : vector<16x16xf32> to vector<16x16xbf16>
    %98 = vector.extract_strided_slice %17 {offsets = [0, 48], sizes = [16, 16], strides = [1, 1]} : vector<16x128xf32> to vector<16x16xf32>
    %99 = arith.truncf %98 : vector<16x16xf32> to vector<16x16xbf16>
    %cst_40 = arith.constant dense<0.000000e+00> : vector<16x16xf32>
    %100 = tpu.matmul %95, %97, %cst_40 {dimension_numbers = #tpu.dot_dimension_numbers<[1], [1], [0], [0], [0, 0, 1, 0], [], []>} : vector<16x16xbf16>, vector<16x16xbf16>, vector<16x16xf32> -> vector<16x16xf32>
    %cst_41 = arith.constant dense<0xFF800000> : vector<16xf32>
    %101 = vector.multi_reduction <maximumf>, %100, %cst_41 [1] : vector<16x16xf32> to vector<16xf32>
    %102 = vector.shape_cast %101 : vector<16xf32> to vector<16x1xf32>
    %103 = vector.broadcast %102 : vector<16x1xf32> to vector<16x16xf32>
    %104 = arith.subf %100, %103 : vector<16x16xf32>
    %105 = math.exp %104 : vector<16x16xf32>
    %cst_42 = arith.constant dense<0.000000e+00> : vector<16xf32>
    %106 = vector.multi_reduction <add>, %105, %cst_42 [1] : vector<16x16xf32> to vector<16xf32>
    %107 = vector.shape_cast %106 : vector<16xf32> to vector<16x1xf32>
    %108 = arith.truncf %105 : vector<16x16xf32> to vector<16x16xbf16>
    %cst_43 = arith.constant dense<0.000000e+00> : vector<16x16xf32>
    %109 = tpu.matmul %108, %99, %cst_43 {dimension_numbers = #tpu.dot_dimension_numbers<[1], [0], [0], [1], [0, 0, 1, 1], [], []>} : vector<16x16xbf16>, vector<16x16xbf16>, vector<16x16xf32> -> vector<16x16xf32>
    %cst_44 = arith.constant 1.000000e+00 : f32
    %110 = vector.broadcast %cst_44 : f32 to vector<16x1xf32>
    %111 = arith.divf %110, %107 : vector<16x1xf32>
    %112 = vector.broadcast %111 : vector<16x1xf32> to vector<16x16xf32>
    %113 = arith.mulf %109, %112 : vector<16x16xf32>
    %114 = arith.truncf %113 : vector<16x16xf32> to vector<16x16xbf16>
    %c3 = arith.constant 3 : index
    %c0_45 = arith.constant 0 : index
    %c0_46 = arith.constant 0 : index
    %115 = vector.load %arg7[%c3, %c0_45, %c0_46] : memref<4x16x128xbf16, #tpu.memory_space<vmem>>, vector<1x16x128xbf16>
    %116 = vector.shape_cast %115 : vector<1x16x128xbf16> to vector<16x128xbf16>
    %cst_47 = arith.constant dense<0.000000e+00> : vector<16x128xf32>
    %117 = tpu.matmul %114, %116, %cst_47 {dimension_numbers = #tpu.dot_dimension_numbers<[1], [0], [0], [1], [0, 0, 1, 1], [], []>} : vector<16x16xbf16>, vector<16x128xbf16>, vector<16x128xf32> -> vector<16x128xf32>
    %118 = arith.addf %93, %117 : vector<16x128xf32>
    %119 = arith.addf %1, %118 : vector<16x128xf32>
    %c0_48 = arith.constant 0 : index
    %c0_49 = arith.constant 0 : index
    %120 = vector.load %arg8[%c0_48, %c0_49] : memref<1x128xf32, #tpu.memory_space<vmem>>, vector<1x128xf32>
    %121 = vector.broadcast %120 : vector<1x128xf32> to vector<16x128xf32>
    %122 = arith.addf %119, %121 : vector<16x128xf32>
    %c0_50 = arith.constant 0 : index
    %c0_51 = arith.constant 0 : index
    %123 = vector.load %arg13[%c0_50, %c0_51] : memref<1x128xf32, #tpu.memory_space<vmem>>, vector<1x128xf32>
    %c0_52 = arith.constant 0 : index
    %c0_53 = arith.constant 0 : index
    %124 = vector.load %arg14[%c0_52, %c0_53] : memref<1x128xf32, #tpu.memory_space<vmem>>, vector<1x128xf32>
    %cst_54 = arith.constant dense<0.000000e+00> : vector<16xf32>
    %125 = vector.multi_reduction <add>, %122, %cst_54 [1] : vector<16x128xf32> to vector<16xf32>
    %126 = vector.shape_cast %125 : vector<16xf32> to vector<16x1xf32>
    %cst_55 = arith.constant 1.562500e-02 : f32
    %127 = vector.broadcast %cst_55 : f32 to vector<16x1xf32>
    %128 = arith.mulf %126, %127 : vector<16x1xf32>
    %129 = vector.broadcast %128 : vector<16x1xf32> to vector<16x128xf32>
    %130 = arith.subf %122, %129 : vector<16x128xf32>
    %131 = tpu.iota {dimensions = array<i32: 1>} : vector<16x128xi32>
    %c64_i32 = arith.constant 64 : i32
    %132 = vector.broadcast %c64_i32 : i32 to vector<16x128xi32>
    %133 = arith.cmpi slt, %131, %132 : vector<16x128xi32>
    %cst_56 = arith.constant 0.000000e+00 : f32
    %134 = vector.broadcast %cst_56 : f32 to vector<16x128xf32>
    %135 = arith.select %133, %130, %134 : vector<16x128xi1>, vector<16x128xf32>
    %136 = arith.mulf %135, %135 : vector<16x128xf32>
    %cst_57 = arith.constant dense<0.000000e+00> : vector<16xf32>
    %137 = vector.multi_reduction <add>, %136, %cst_57 [1] : vector<16x128xf32> to vector<16xf32>
    %138 = vector.shape_cast %137 : vector<16xf32> to vector<16x1xf32>
    %cst_58 = arith.constant 1.562500e-02 : f32
    %139 = vector.broadcast %cst_58 : f32 to vector<16x1xf32>
    %140 = arith.mulf %138, %139 : vector<16x1xf32>
    %cst_59 = arith.constant 9.99999974E-6 : f32
    %141 = vector.broadcast %cst_59 : f32 to vector<16x1xf32>
    %142 = arith.addf %140, %141 : vector<16x1xf32>
    %143 = math.rsqrt %142 : vector<16x1xf32>
    %144 = vector.broadcast %143 : vector<16x1xf32> to vector<16x128xf32>
    %145 = arith.mulf %135, %144 : vector<16x128xf32>
    %146 = vector.broadcast %123 : vector<1x128xf32> to vector<16x128xf32>
    %147 = arith.mulf %145, %146 : vector<16x128xf32>
    %148 = vector.broadcast %124 : vector<1x128xf32> to vector<16x128xf32>
    %149 = arith.addf %147, %148 : vector<16x128xf32>
    %150 = arith.truncf %149 : vector<16x128xf32> to vector<16x128xbf16>
    %c0_60 = arith.constant 0 : index
    %c0_61 = arith.constant 0 : index
    %151 = vector.load %arg9[%c0_60, %c0_61] : memref<128x128xbf16, #tpu.memory_space<vmem>>, vector<128x128xbf16>
    %cst_62 = arith.constant dense<0.000000e+00> : vector<16x128xf32>
    %152 = tpu.matmul %150, %151, %cst_62 {dimension_numbers = #tpu.dot_dimension_numbers<[1], [0], [0], [1], [0, 0, 1, 1], [], []>} : vector<16x128xbf16>, vector<128x128xbf16>, vector<16x128xf32> -> vector<16x128xf32>
    %c0_63 = arith.constant 0 : index
    %c0_64 = arith.constant 0 : index
    %153 = vector.load %arg10[%c0_63, %c0_64] : memref<1x128xf32, #tpu.memory_space<vmem>>, vector<1x128xf32>
    %154 = vector.broadcast %153 : vector<1x128xf32> to vector<16x128xf32>
    %155 = arith.addf %152, %154 : vector<16x128xf32>
    %cst_65 = arith.constant 0.000000e+00 : f32
    %156 = vector.broadcast %cst_65 : f32 to vector<16x128xf32>
    %157 = arith.maximumf %155, %156 : vector<16x128xf32>
    %158 = arith.truncf %157 : vector<16x128xf32> to vector<16x128xbf16>
    %c0_66 = arith.constant 0 : index
    %c0_67 = arith.constant 0 : index
    %159 = vector.load %arg11[%c0_66, %c0_67] : memref<128x128xbf16, #tpu.memory_space<vmem>>, vector<128x128xbf16>
    %cst_68 = arith.constant dense<0.000000e+00> : vector<16x128xf32>
    %160 = tpu.matmul %158, %159, %cst_68 {dimension_numbers = #tpu.dot_dimension_numbers<[1], [0], [0], [1], [0, 0, 1, 1], [], []>} : vector<16x128xbf16>, vector<128x128xbf16>, vector<16x128xf32> -> vector<16x128xf32>
    %c0_69 = arith.constant 0 : index
    %c0_70 = arith.constant 0 : index
    %161 = vector.load %arg12[%c0_69, %c0_70] : memref<1x128xf32, #tpu.memory_space<vmem>>, vector<1x128xf32>
    %162 = vector.broadcast %161 : vector<1x128xf32> to vector<16x128xf32>
    %163 = arith.addf %160, %162 : vector<16x128xf32>
    %164 = arith.addf %149, %163 : vector<16x128xf32>
    %c0_71 = arith.constant 0 : index
    %c0_72 = arith.constant 0 : index
    %165 = vector.load %arg15[%c0_71, %c0_72] : memref<1x128xf32, #tpu.memory_space<vmem>>, vector<1x128xf32>
    %c0_73 = arith.constant 0 : index
    %c0_74 = arith.constant 0 : index
    %166 = vector.load %arg16[%c0_73, %c0_74] : memref<1x128xf32, #tpu.memory_space<vmem>>, vector<1x128xf32>
    %cst_75 = arith.constant dense<0.000000e+00> : vector<16xf32>
    %167 = vector.multi_reduction <add>, %164, %cst_75 [1] : vector<16x128xf32> to vector<16xf32>
    %168 = vector.shape_cast %167 : vector<16xf32> to vector<16x1xf32>
    %cst_76 = arith.constant 1.562500e-02 : f32
    %169 = vector.broadcast %cst_76 : f32 to vector<16x1xf32>
    %170 = arith.mulf %168, %169 : vector<16x1xf32>
    %171 = vector.broadcast %170 : vector<16x1xf32> to vector<16x128xf32>
    %172 = arith.subf %164, %171 : vector<16x128xf32>
    %173 = tpu.iota {dimensions = array<i32: 1>} : vector<16x128xi32>
    %c64_i32_77 = arith.constant 64 : i32
    %174 = vector.broadcast %c64_i32_77 : i32 to vector<16x128xi32>
    %175 = arith.cmpi slt, %173, %174 : vector<16x128xi32>
    %cst_78 = arith.constant 0.000000e+00 : f32
    %176 = vector.broadcast %cst_78 : f32 to vector<16x128xf32>
    %177 = arith.select %175, %172, %176 : vector<16x128xi1>, vector<16x128xf32>
    %178 = arith.mulf %177, %177 : vector<16x128xf32>
    %cst_79 = arith.constant dense<0.000000e+00> : vector<16xf32>
    %179 = vector.multi_reduction <add>, %178, %cst_79 [1] : vector<16x128xf32> to vector<16xf32>
    %180 = vector.shape_cast %179 : vector<16xf32> to vector<16x1xf32>
    %cst_80 = arith.constant 1.562500e-02 : f32
    %181 = vector.broadcast %cst_80 : f32 to vector<16x1xf32>
    %182 = arith.mulf %180, %181 : vector<16x1xf32>
    %cst_81 = arith.constant 9.99999974E-6 : f32
    %183 = vector.broadcast %cst_81 : f32 to vector<16x1xf32>
    %184 = arith.addf %182, %183 : vector<16x1xf32>
    %185 = math.rsqrt %184 : vector<16x1xf32>
    %186 = vector.broadcast %185 : vector<16x1xf32> to vector<16x128xf32>
    %187 = arith.mulf %177, %186 : vector<16x128xf32>
    %188 = vector.broadcast %165 : vector<1x128xf32> to vector<16x128xf32>
    %189 = arith.mulf %187, %188 : vector<16x128xf32>
    %190 = vector.broadcast %166 : vector<1x128xf32> to vector<16x128xf32>
    %191 = arith.addf %189, %190 : vector<16x128xf32>
    %c0_82 = arith.constant 0 : index
    %c0_83 = arith.constant 0 : index
    %c0_84 = arith.constant 0 : index
    %192 = vector.load %arg17[%c0_82, %c0_83, %c0_84] : memref<1x16x128xf32, #tpu.memory_space<vmem>>, vector<1x16x128xf32>
    %193 = vector.shape_cast %192 : vector<1x16x128xf32> to vector<16x128xf32>
    %194 = vector.shape_cast %191 : vector<16x128xf32> to vector<1x16x128xf32>
    tpu.vector_store %arg17[%c0_82, %c0_83, %c0_84], %194 {strides = array<i32>} : memref<1x16x128xf32, #tpu.memory_space<vmem>>, vector<1x16x128xf32>,
    return
  }
  func.func @transform_0(%arg0: i32) -> (i32, i32, i32) {
    %c0_i32 = arith.constant 0 : i32
    %c0_i32_0 = arith.constant 0 : i32
    %c0_i32_1 = arith.constant 0 : i32
    return %arg0, %c0_i32, %c0_i32_0 : i32, i32, i32
  }
  func.func @transform_1(%arg0: i32) -> (i32, i32, i32) {
    %c0_i32 = arith.constant 0 : i32
    %c0_i32_0 = arith.constant 0 : i32
    %c0_i32_1 = arith.constant 0 : i32
    return %arg0, %c0_i32, %c0_i32_0 : i32, i32, i32
  }
  func.func @transform_2(%arg0: i32) -> (i32, i32) {
    %c0_i32 = arith.constant 0 : i32
    %c0_i32_0 = arith.constant 0 : i32
    %c0_i32_1 = arith.constant 0 : i32
    return %c0_i32, %c0_i32_0 : i32, i32
  }
  func.func @transform_3(%arg0: i32) -> (i32, i32) {
    %c0_i32 = arith.constant 0 : i32
    %c0_i32_0 = arith.constant 0 : i32
    %c0_i32_1 = arith.constant 0 : i32
    return %c0_i32, %c0_i32_0 : i32, i32
  }
  func.func @transform_4(%arg0: i32) -> (i32, i32) {
    %c0_i32 = arith.constant 0 : i32
    %c0_i32_0 = arith.constant 0 : i32
    %c0_i32_1 = arith.constant 0 : i32
    return %c0_i32, %c0_i32_0 : i32, i32
  }
  func.func @transform_5(%arg0: i32) -> (i32, i32) {
    %c0_i32 = arith.constant 0 : i32
    %c0_i32_0 = arith.constant 0 : i32
    %c0_i32_1 = arith.constant 0 : i32
    return %c0_i32, %c0_i32_0 : i32, i32
  }
  func.func @transform_6(%arg0: i32) -> (i32, i32, i32) {
    %c0_i32 = arith.constant 0 : i32
    %c0_i32_0 = arith.constant 0 : i32
    %c0_i32_1 = arith.constant 0 : i32
    %c0_i32_2 = arith.constant 0 : i32
    return %c0_i32, %c0_i32_0, %c0_i32_1 : i32, i32, i32
  }
  func.func @transform_7(%arg0: i32) -> (i32, i32) {
    %c0_i32 = arith.constant 0 : i32
    %c0_i32_0 = arith.constant 0 : i32
    %c0_i32_1 = arith.constant 0 : i32
    return %c0_i32, %c0_i32_0 : i32, i32
  }
  func.func @transform_8(%arg0: i32) -> (i32, i32) {
    %c0_i32 = arith.constant 0 : i32
    %c0_i32_0 = arith.constant 0 : i32
    %c0_i32_1 = arith.constant 0 : i32
    return %c0_i32, %c0_i32_0 : i32, i32
  }
  func.func @transform_9(%arg0: i32) -> (i32, i32) {
    %c0_i32 = arith.constant 0 : i32
    %c0_i32_0 = arith.constant 0 : i32
    %c0_i32_1 = arith.constant 0 : i32
    return %c0_i32, %c0_i32_0 : i32, i32
  }
  func.func @transform_10(%arg0: i32) -> (i32, i32) {
    %c0_i32 = arith.constant 0 : i32
    %c0_i32_0 = arith.constant 0 : i32
    %c0_i32_1 = arith.constant 0 : i32
    return %c0_i32, %c0_i32_0 : i32, i32
  }
  func.func @transform_11(%arg0: i32) -> (i32, i32) {
    %c0_i32 = arith.constant 0 : i32
    %c0_i32_0 = arith.constant 0 : i32
    %c0_i32_1 = arith.constant 0 : i32
    return %c0_i32, %c0_i32_0 : i32, i32
  }
  func.func @transform_12(%arg0: i32) -> (i32, i32) {
    %c0_i32 = arith.constant 0 : i32
    %c0_i32_0 = arith.constant 0 : i32
    %c0_i32_1 = arith.constant 0 : i32
    return %c0_i32, %c0_i32_0 : i32, i32
  }
  func.func @transform_13(%arg0: i32) -> (i32, i32) {
    %c0_i32 = arith.constant 0 : i32
    %c0_i32_0 = arith.constant 0 : i32
    %c0_i32_1 = arith.constant 0 : i32
    return %c0_i32, %c0_i32_0 : i32, i32
  }
  func.func @transform_14(%arg0: i32) -> (i32, i32) {
    %c0_i32 = arith.constant 0 : i32
    %c0_i32_0 = arith.constant 0 : i32
    %c0_i32_1 = arith.constant 0 : i32
    return %c0_i32, %c0_i32_0 : i32, i32
  }
  func.func @transform_15(%arg0: i32) -> (i32, i32) {
    %c0_i32 = arith.constant 0 : i32
    %c0_i32_0 = arith.constant 0 : i32
    %c0_i32_1 = arith.constant 0 : i32
    return %c0_i32, %c0_i32_0 : i32, i32
  }
  func.func @transform_16(%arg0: i32) -> (i32, i32, i32) {
    %c0_i32 = arith.constant 0 : i32
    %c0_i32_0 = arith.constant 0 : i32
    %c0_i32_1 = arith.constant 0 : i32
    return %arg0, %c0_i32, %c0_i32_0 : i32, i32, i32
  }
}

</mosaic_0001>

<llo_original>
// kernel: tpu_custom_call.1
$region0: #{tpu_custom_call.1}
  #allocation0 [shape = 'u32[]', space=smem, size = 0x4, offset = 0x4, fixed_abs, tag = 'smem constant byte address 0x4 - core index']
  #allocation1 [shape = 'u32[144,128]{1,0:T(1,128)}', space=vmem, size = 0x12000, scoped, tag = 'internal scratch']
  %s0 = inlined_call_operand.hbm [shape: f32[2,16,128], index: 0, kind: input, shape index: {}]
  %s1 = inlined_call_operand.hbm [shape: bf16[2,16,128], index: 1, kind: input, shape index: {}]
  %s2 = inlined_call_operand.hbm [shape: bf16[128,256], index: 2, kind: input, shape index: {}]
  %s3 = inlined_call_operand.vmem [shape: f32[1,256], index: 3, kind: input, shape index: {}]
  %s4 = inlined_call_operand.hbm [shape: bf16[128,128], index: 4, kind: input, shape index: {}]
  %s5 = inlined_call_operand.vmem [shape: f32[1,128], index: 5, kind: input, shape index: {}]
  %s6 = inlined_call_operand.hbm [shape: bf16[4,16,128], index: 6, kind: input, shape index: {}]
  %s7 = inlined_call_operand.vmem [shape: f32[1,128], index: 7, kind: input, shape index: {}]
  %s8 = inlined_call_operand.hbm [shape: bf16[128,128], index: 8, kind: input, shape index: {}]
  %s9 = inlined_call_operand.vmem [shape: f32[1,128], index: 9, kind: input, shape index: {}]
  %s10 = inlined_call_operand.hbm [shape: bf16[128,128], index: 10, kind: input, shape index: {}]
  %s11 = inlined_call_operand.vmem [shape: f32[1,128], index: 11, kind: input, shape index: {}]
  %s12 = inlined_call_operand.vmem [shape: f32[1,128], index: 12, kind: input, shape index: {}]
  %s13 = inlined_call_operand.vmem [shape: f32[1,128], index: 13, kind: input, shape index: {}]
  %s14 = inlined_call_operand.vmem [shape: f32[1,128], index: 14, kind: input, shape index: {}]
  %s15 = inlined_call_operand.vmem [shape: f32[1,128], index: 15, kind: input, shape index: {}]
  %s16 = inlined_call_operand.hbm [shape: f32[2,16,128], index: 16, kind: output, shape index: {}]
  %s17 = sld [smem:[#allocation0]]
  $region125: #{tpu_custom_call.1} parent=0
    _
  %s19 = ssub.s32 1, %s17
  %s20 = scalar_select 0, %s19, %s17
  $region1: #{tpu_custom_call.1} parent=0
    #allocation2 [shape = 'u8[16384]{0}', space=vmem, size = 0x4000, scoped, tag = 'input window, operand 0']
    #allocation3 [shape = 's32[2]{0}', space=sflag, size = 0x8, scoped, tag = 'scoped memory for tpu_custom_call.1']
    #allocation4 [shape = 's32[2]{0}', space=sflag, size = 0x8, scoped, tag = 'scoped memory for tpu_custom_call.1']
    #allocation5 [shape = 'u8[8192]{0}', space=vmem, size = 0x2000, scoped, tag = 'input window, operand 1']
    #allocation6 [shape = 's32[2]{0}', space=sflag, size = 0x8, scoped, tag = 'scoped memory for tpu_custom_call.1']
    #allocation7 [shape = 'u8[65536]{0}', space=vmem, size = 0x10000, scoped, tag = 'input window, operand 2, single buffered']
    #allocation8 [shape = 'u8[32768]{0}', space=vmem, size = 0x8000, scoped, tag = 'input window, operand 4, single buffered']
    #allocation9 [shape = 's32[1]{0}', space=sflag, size = 0x4, scoped, tag = 'scoped memory for tpu_custom_call.1']
    #allocation10 [shape = 'u8[16384]{0}', space=vmem, size = 0x4000, scoped, tag = 'input window, operand 6, single buffered']
    #allocation11 [shape = 'u8[32768]{0}', space=vmem, size = 0x8000, scoped, tag = 'input window, operand 8, single buffered']
    #allocation12 [shape = 's32[1]{0}', space=sflag, size = 0x4, scoped, tag = 'scoped memory for tpu_custom_call.1']
    #allocation13 [shape = 'u8[32768]{0}', space=vmem, size = 0x8000, scoped, tag = 'input window, operand 10, single buffered']
    #allocation14 [shape = 'u8[16384]{0}', space=vmem, size = 0x4000, scoped, tag = 'output window, operand 0']
    %21 = vsyncpa [#allocation3], 0
    %s22 = scalar_lea.sflag [#allocation3], 1
    %23 = vsyncpa %s22, 0
    %24 = vsyncpa [#allocation6], 0
    %s25 = scalar_lea.sflag [#allocation6], 1
    %26 = vsyncpa %s25, 0
    %27 = vsyncpa [#allocation9], 0
    %28 = vsyncpa [#allocation12], 0
    %29 = vsyncpa [#allocation4], 0
    %s30 = scalar_lea.sflag [#allocation4], 1
    %31 = vsyncpa %s30, 0
    loop: start=0, step=1, limit=4
    $region2: #{tpu_custom_call.1} parent=1 // loop_pre_header
      _
    $region3: #{tpu_custom_call.1} parent=1 // loop_header
      %s33 = sphi 0, %s37
      %p34 = scmp.ge.s32.totalorder %s33, 4
      %s43 = sphi 0, %s45
      %s46 = sphi 0, %s43
      %s47 = sphi 0, %s46
      %s63 = sphi 0, %s47
      %s69 = sphi 0, %s71
      %s72 = sphi 0, %s69
      %s73 = sphi 0, %s72
      %s89 = sphi 0, %s73
      %s93 = sphi 0, %s93
      %s95 = sphi 0, %s93
      %s96 = sphi 0, %s95
      %s110 = sphi 0, %s96
      %s114 = sphi 0, %s114
      %s116 = sphi 0, %s114
      %s117 = sphi 0, %s116
      %s131 = sphi 0, %s117
      %s135 = sphi 0, %s135
      %s137 = sphi 0, %s135
      %s138 = sphi 0, %s137
      %s152 = sphi 0, %s138
      %s156 = sphi 0, %s156
      %s158 = sphi 0, %s156
      %s159 = sphi 0, %s158
      %s173 = sphi 0, %s159
      %s177 = sphi 0, %s177
      %s179 = sphi 0, %s177
      %s180 = sphi 0, %s179
      %s194 = sphi 0, %s180
      %s198 = sphi 0, %s198
      %s200 = sphi 0, %s198
      %s201 = sphi 0, %s200
      %s215 = sphi 0, %s201
      %s219 = sphi 0, %s219
      %s221 = sphi 0, %s219
      %s222 = sphi 0, %s221
      %s236 = sphi 0, %s222
      %s240 = sphi 0, %s240
      %s242 = sphi 0, %s240
      %s243 = sphi 0, %s242
      %s257 = sphi 0, %s243
      %s261 = sphi 0, %s261
      %s263 = sphi 0, %s261
      %s264 = sphi 0, %s263
      %s278 = sphi 0, %s264
      %s282 = sphi 0, %s282
      %s284 = sphi 0, %s282
      %s285 = sphi 0, %s284
      %s299 = sphi 0, %s285
      %s303 = sphi 0, %s303
      %s305 = sphi 0, %s303
      %s306 = sphi 0, %s305
      %s320 = sphi 0, %s306
      %s324 = sphi 0, %s324
      %s326 = sphi 0, %s324
      %s327 = sphi 0, %s326
      %s341 = sphi 0, %s327
      %s345 = sphi 0, %s345
      %s347 = sphi 0, %s345
      %s348 = sphi 0, %s347
      %s362 = sphi 0, %s348
      %s366 = sphi 0, %s366
      %s368 = sphi 0, %s366
      %s369 = sphi 0, %s368
      %s383 = sphi 0, %s369
      %s389 = sphi 0, %s391
      %s392 = sphi 0, %s389
      %s393 = sphi 0, %s392
      %s409 = sphi 0, %s393
    $region4: #{tpu_custom_call.1} parent=1 // loop_header_branch
      %36 = sbr.rel (%p34) target = $region8
    $region5: #{tpu_custom_call.1} parent=1 // loop_body
      %s38 = ssub.s32 %s33, 1
      %s39 = ssub.s32 %s33, 2
      %s40 = sadd.s32 %s33, 1
      %s41 = ssub.s32 %s33, %s40
      %p42 = scmp.eq.s32.totalorder %s41, 0
      %s44 = sadd.s32 %s43, 1
      %s45 = scalar_select %p42, %s43, %s44
      %p48 = pneg %p42
      %p49 = scmp.eq.s32.totalorder %s33, 1
      %p50 = por %p48, %p49
      %p51 = scmp.ne.s32.totalorder %s43, %s46
      %p52 = scmp.eq.s32.totalorder %s33, 0
      %p53 = por %p51, %p52
      %p54 = scmp.ne.s32.totalorder %s43, %s46
      %p55 = scmp.eq.s32.totalorder %s38, 1
      %p56 = por %p54, %p55
      %p57 = scmp.ne.s32.totalorder %s46, %s47
      %p58 = scmp.eq.s32.totalorder %s38, 0
      %p59 = por %p57, %p58
      %p60 = scmp.ne.s32.totalorder %s46, %s47
      %p61 = scmp.eq.s32.totalorder %s39, 1
      %p62 = por %p60, %p61
      %p64 = scmp.ne.s32.totalorder %s47, %s63
      %p65 = scmp.eq.s32.totalorder %s39, 0
      %p66 = por %p64, %p65
      %s67 = ssub.s32 %s33, %s40
      %p68 = scmp.eq.s32.totalorder %s67, 0
      %s70 = sadd.s32 %s69, 1
      %s71 = scalar_select %p68, %s69, %s70
      %p74 = pneg %p68
      %p75 = scmp.eq.s32.totalorder %s33, 1
      %p76 = por %p74, %p75
      %p77 = scmp.ne.s32.totalorder %s69, %s72
      %p78 = scmp.eq.s32.totalorder %s33, 0
      %p79 = por %p77, %p78
      %p80 = scmp.ne.s32.totalorder %s69, %s72
      %p81 = scmp.eq.s32.totalorder %s38, 1
      %p82 = por %p80, %p81
      %p83 = scmp.ne.s32.totalorder %s72, %s73
      %p84 = scmp.eq.s32.totalorder %s38, 0
      %p85 = por %p83, %p84
      %p86 = scmp.ne.s32.totalorder %s72, %s73
      %p87 = scmp.eq.s32.totalorder %s39, 1
      %p88 = por %p86, %p87
      %p90 = scmp.ne.s32.totalorder %s73, %s89
      %p91 = scmp.eq.s32.totalorder %s39, 0
      %p92 = por %p90, %p91
      %s94 = sadd.s32 %s93, 1
      %p97 = scmp.eq.s32.totalorder %s33, 1
      %p98 = scmp.ne.s32.totalorder %s93, %s95
      %p99 = scmp.eq.s32.totalorder %s33, 0
      %p100 = por %p98, %p99
      %p101 = scmp.ne.s32.totalorder %s93, %s95
      %p102 = scmp.eq.s32.totalorder %s38, 1
      %p103 = por %p101, %p102
      %p104 = scmp.ne.s32.totalorder %s95, %s96
      %p105 = scmp.eq.s32.totalorder %s38, 0
      %p106 = por %p104, %p105
      %p107 = scmp.ne.s32.totalorder %s95, %s96
      %p108 = scmp.eq.s32.totalorder %s39, 1
      %p109 = por %p107, %p108
      %p111 = scmp.ne.s32.totalorder %s96, %s110
      %p112 = scmp.eq.s32.totalorder %s39, 0
      %p113 = por %p111, %p112
      %s115 = sadd.s32 %s114, 1
      %p118 = scmp.eq.s32.totalorder %s33, 1
      %p119 = scmp.ne.s32.totalorder %s114, %s116
      %p120 = scmp.eq.s32.totalorder %s33, 0
      %p121 = por %p119, %p120
      %p122 = scmp.ne.s32.totalorder %s114, %s116
      %p123 = scmp.eq.s32.totalorder %s38, 1
      %p124 = por %p122, %p123
      %p125 = scmp.ne.s32.totalorder %s116, %s117
      %p126 = scmp.eq.s32.totalorder %s38, 0
      %p127 = por %p125, %p126
      %p128 = scmp.ne.s32.totalorder %s116, %s117
      %p129 = scmp.eq.s32.totalorder %s39, 1
      %p130 = por %p128, %p129
      %p132 = scmp.ne.s32.totalorder %s117, %s131
      %p133 = scmp.eq.s32.totalorder %s39, 0
      %p134 = por %p132, %p133
      %s136 = sadd.s32 %s135, 1
      %p139 = scmp.eq.s32.totalorder %s33, 1
      %p140 = scmp.ne.s32.totalorder %s135, %s137
      %p141 = scmp.eq.s32.totalorder %s33, 0
      %p142 = por %p140, %p141
      %p143 = scmp.ne.s32.totalorder %s135, %s137
      %p144 = scmp.eq.s32.totalorder %s38, 1
      %p145 = por %p143, %p144
      %p146 = scmp.ne.s32.totalorder %s137, %s138
      %p147 = scmp.eq.s32.totalorder %s38, 0
      %p148 = por %p146, %p147
      %p149 = scmp.ne.s32.totalorder %s137, %s138
      %p150 = scmp.eq.s32.totalorder %s39, 1
      %p151 = por %p149, %p150
      %p153 = scmp.ne.s32.totalorder %s138, %s152
      %p154 = scmp.eq.s32.totalorder %s39, 0
      %p155 = por %p153, %p154
      %s157 = sadd.s32 %s156, 1
      %p160 = scmp.eq.s32.totalorder %s33, 1
      %p161 = scmp.ne.s32.totalorder %s156, %s158
      %p162 = scmp.eq.s32.totalorder %s33, 0
      %p163 = por %p161, %p162
      %p164 = scmp.ne.s32.totalorder %s156, %s158
      %p165 = scmp.eq.s32.totalorder %s38, 1
      %p166 = por %p164, %p165
      %p167 = scmp.ne.s32.totalorder %s158, %s159
      %p168 = scmp.eq.s32.totalorder %s38, 0
      %p169 = por %p167, %p168
      %p170 = scmp.ne.s32.totalorder %s158, %s159
      %p171 = scmp.eq.s32.totalorder %s39, 1
      %p172 = por %p170, %p171
      %p174 = scmp.ne.s32.totalorder %s159, %s173
      %p175 = scmp.eq.s32.totalorder %s39, 0
      %p176 = por %p174, %p175
      %s178 = sadd.s32 %s177, 1
      %p181 = scmp.eq.s32.totalorder %s33, 1
      %p182 = scmp.ne.s32.totalorder %s177, %s179
      %p183 = scmp.eq.s32.totalorder %s33, 0
      %p184 = por %p182, %p183
      %p185 = scmp.ne.s32.totalorder %s177, %s179
      %p186 = scmp.eq.s32.totalorder %s38, 1
      %p187 = por %p185, %p186
      %p188 = scmp.ne.s32.totalorder %s179, %s180
      %p189 = scmp.eq.s32.totalorder %s38, 0
      %p190 = por %p188, %p189
      %p191 = scmp.ne.s32.totalorder %s179, %s180
      %p192 = scmp.eq.s32.totalorder %s39, 1
      %p193 = por %p191, %p192
      %p195 = scmp.ne.s32.totalorder %s180, %s194
      %p196 = scmp.eq.s32.totalorder %s39, 0
      %p197 = por %p195, %p196
      %s199 = sadd.s32 %s198, 1
      %p202 = scmp.eq.s32.totalorder %s33, 1
      %p203 = scmp.ne.s32.totalorder %s198, %s200
      %p204 = scmp.eq.s32.totalorder %s33, 0
      %p205 = por %p203, %p204
      %p206 = scmp.ne.s32.totalorder %s198, %s200
      %p207 = scmp.eq.s32.totalorder %s38, 1
      %p208 = por %p206, %p207
      %p209 = scmp.ne.s32.totalorder %s200, %s201
      %p210 = scmp.eq.s32.totalorder %s38, 0
      %p211 = por %p209, %p210
      %p212 = scmp.ne.s32.totalorder %s200, %s201
      %p213 = scmp.eq.s32.totalorder %s39, 1
      %p214 = por %p212, %p213
      %p216 = scmp.ne.s32.totalorder %s201, %s215
      %p217 = scmp.eq.s32.totalorder %s39, 0
      %p218 = por %p216, %p217
      %s220 = sadd.s32 %s219, 1
      %p223 = scmp.eq.s32.totalorder %s33, 1
      %p224 = scmp.ne.s32.totalorder %s219, %s221
      %p225 = scmp.eq.s32.totalorder %s33, 0
      %p226 = por %p224, %p225
      %p227 = scmp.ne.s32.totalorder %s219, %s221
      %p228 = scmp.eq.s32.totalorder %s38, 1
      %p229 = por %p227, %p228
      %p230 = scmp.ne.s32.totalorder %s221, %s222
      %p231 = scmp.eq.s32.totalorder %s38, 0
      %p232 = por %p230, %p231
      %p233 = scmp.ne.s32.totalorder %s221, %s222
      %p234 = scmp.eq.s32.totalorder %s39, 1
      %p235 = por %p233, %p234
      %p237 = scmp.ne.s32.totalorder %s222, %s236
      %p238 = scmp.eq.s32.totalorder %s39, 0
      %p239 = por %p237, %p238
      %s241 = sadd.s32 %s240, 1
      %p244 = scmp.eq.s32.totalorder %s33, 1
      %p245 = scmp.ne.s32.totalorder %s240, %s242
      %p246 = scmp.eq.s32.totalorder %s33, 0
      %p247 = por %p245, %p246
      %p248 = scmp.ne.s32.totalorder %s240, %s242
      %p249 = scmp.eq.s32.totalorder %s38, 1
      %p250 = por %p248, %p249
      %p251 = scmp.ne.s32.totalorder %s242, %s243
      %p252 = scmp.eq.s32.totalorder %s38, 0
      %p253 = por %p251, %p252
      %p254 = scmp.ne.s32.totalorder %s242, %s243
      %p255 = scmp.eq.s32.totalorder %s39, 1
      %p256 = por %p254, %p255
      %p258 = scmp.ne.s32.totalorder %s243, %s257
      %p259 = scmp.eq.s32.totalorder %s39, 0
      %p260 = por %p258, %p259
      %s262 = sadd.s32 %s261, 1
      %p265 = scmp.eq.s32.totalorder %s33, 1
      %p266 = scmp.ne.s32.totalorder %s261, %s263
      %p267 = scmp.eq.s32.totalorder %s33, 0
      %p268 = por %p266, %p267
      %p269 = scmp.ne.s32.totalorder %s261, %s263
      %p270 = scmp.eq.s32.totalorder %s38, 1
      %p271 = por %p269, %p270
      %p272 = scmp.ne.s32.totalorder %s263, %s264
      %p273 = scmp.eq.s32.totalorder %s38, 0
      %p274 = por %p272, %p273
      %p275 = scmp.ne.s32.totalorder %s263, %s264
      %p276 = scmp.eq.s32.totalorder %s39, 1
      %p277 = por %p275, %p276
      %p279 = scmp.ne.s32.totalorder %s264, %s278
      %p280 = scmp.eq.s32.totalorder %s39, 0
      %p281 = por %p279, %p280
      %s283 = sadd.s32 %s282, 1
      %p286 = scmp.eq.s32.totalorder %s33, 1
      %p287 = scmp.ne.s32.totalorder %s282, %s284
      %p288 = scmp.eq.s32.totalorder %s33, 0
      %p289 = por %p287, %p288
      %p290 = scmp.ne.s32.totalorder %s282, %s284
      %p291 = scmp.eq.s32.totalorder %s38, 1
      %p292 = por %p290, %p291
      %p293 = scmp.ne.s32.totalorder %s284, %s285
      %p294 = scmp.eq.s32.totalorder %s38, 0
      %p295 = por %p293, %p294
      %p296 = scmp.ne.s32.totalorder %s284, %s285
      %p297 = scmp.eq.s32.totalorder %s39, 1
      %p298 = por %p296, %p297
      %p300 = scmp.ne.s32.totalorder %s285, %s299
      %p301 = scmp.eq.s32.totalorder %s39, 0
      %p302 = por %p300, %p301
      %s304 = sadd.s32 %s303, 1
      %p307 = scmp.eq.s32.totalorder %s33, 1
      %p308 = scmp.ne.s32.totalorder %s303, %s305
      %p309 = scmp.eq.s32.totalorder %s33, 0
      %p310 = por %p308, %p309
      %p311 = scmp.ne.s32.totalorder %s303, %s305
      %p312 = scmp.eq.s32.totalorder %s38, 1
      %p313 = por %p311, %p312
      %p314 = scmp.ne.s32.totalorder %s305, %s306
      %p315 = scmp.eq.s32.totalorder %s38, 0
      %p316 = por %p314, %p315
      %p317 = scmp.ne.s32.totalorder %s305, %s306
      %p318 = scmp.eq.s32.totalorder %s39, 1
      %p319 = por %p317, %p318
      %p321 = scmp.ne.s32.totalorder %s306, %s320
      %p322 = scmp.eq.s32.totalorder %s39, 0
      %p323 = por %p321, %p322
      %s325 = sadd.s32 %s324, 1
      %p328 = scmp.eq.s32.totalorder %s33, 1
      %p329 = scmp.ne.s32.totalorder %s324, %s326
      %p330 = scmp.eq.s32.totalorder %s33, 0
      %p331 = por %p329, %p330
      %p332 = scmp.ne.s32.totalorder %s324, %s326
      %p333 = scmp.eq.s32.totalorder %s38, 1
      %p334 = por %p332, %p333
      %p335 = scmp.ne.s32.totalorder %s326, %s327
      %p336 = scmp.eq.s32.totalorder %s38, 0
      %p337 = por %p335, %p336
      %p338 = scmp.ne.s32.totalorder %s326, %s327
      %p339 = scmp.eq.s32.totalorder %s39, 1
      %p340 = por %p338, %p339
      %p342 = scmp.ne.s32.totalorder %s327, %s341
      %p343 = scmp.eq.s32.totalorder %s39, 0
      %p344 = por %p342, %p343
      %s346 = sadd.s32 %s345, 1
      %p349 = scmp.eq.s32.totalorder %s33, 1
      %p350 = scmp.ne.s32.totalorder %s345, %s347
      %p351 = scmp.eq.s32.totalorder %s33, 0
      %p352 = por %p350, %p351
      %p353 = scmp.ne.s32.totalorder %s345, %s347
      %p354 = scmp.eq.s32.totalorder %s38, 1
      %p355 = por %p353, %p354
      %p356 = scmp.ne.s32.totalorder %s347, %s348
      %p357 = scmp.eq.s32.totalorder %s38, 0
      %p358 = por %p356, %p357
      %p359 = scmp.ne.s32.totalorder %s347, %s348
      %p360 = scmp.eq.s32.totalorder %s39, 1
      %p361 = por %p359, %p360
      %p363 = scmp.ne.s32.totalorder %s348, %s362
      %p364 = scmp.eq.s32.totalorder %s39, 0
      %p365 = por %p363, %p364
      %s367 = sadd.s32 %s366, 1
      %p370 = scmp.eq.s32.totalorder %s33, 1
      %p371 = scmp.ne.s32.totalorder %s366, %s368
      %p372 = scmp.eq.s32.totalorder %s33, 0
      %p373 = por %p371, %p372
      %p374 = scmp.ne.s32.totalorder %s366, %s368
      %p375 = scmp.eq.s32.totalorder %s38, 1
      %p376 = por %p374, %p375
      %p377 = scmp.ne.s32.totalorder %s368, %s369
      %p378 = scmp.eq.s32.totalorder %s38, 0
      %p379 = por %p377, %p378
      %p380 = scmp.ne.s32.totalorder %s368, %s369
      %p381 = scmp.eq.s32.totalorder %s39, 1
      %p382 = por %p380, %p381
      %p384 = scmp.ne.s32.totalorder %s369, %s383
      %p385 = scmp.eq.s32.totalorder %s39, 0
      %p386 = por %p384, %p385
      %s387 = ssub.s32 %s33, %s40
      %p388 = scmp.eq.s32.totalorder %s387, 0
      %s390 = sadd.s32 %s389, 1
      %s391 = scalar_select %p388, %s389, %s390
      %p394 = pneg %p388
      %p395 = scmp.eq.s32.totalorder %s33, 1
      %p396 = por %p394, %p395
      %p397 = scmp.ne.s32.totalorder %s389, %s392
      %p398 = scmp.eq.s32.totalorder %s33, 0
      %p399 = por %p397, %p398
      %p400 = scmp.ne.s32.totalorder %s389, %s392
      %p401 = scmp.eq.s32.totalorder %s38, 1
      %p402 = por %p400, %p401
      %p403 = scmp.ne.s32.totalorder %s392, %s393
      %p404 = scmp.eq.s32.totalorder %s38, 0
      %p405 = por %p403, %p404
      %p406 = scmp.ne.s32.totalorder %s392, %s393
      %p407 = scmp.eq.s32.totalorder %s39, 1
      %p408 = por %p406, %p407
      %p410 = scmp.ne.s32.totalorder %s393, %s409
      %p411 = scmp.eq.s32.totalorder %s39, 0
      %p412 = por %p410, %p411
      %p413 = scmp.le.s32.totalorder 1, %s33
      %p414 = scmp.lt.s32.totalorder %s33, 3
      %p415 = pnand %p413, %p414
      %p416 = pneg %p415
      // Predicated region
      $region9: #{tpu_custom_call.1} parent=5 // pred_check
        _
      $region10: #{tpu_custom_call.1} parent=5 // pred_check_branch
        %418 = sbr.rel (%p415) target = $region12
      $region11: #{tpu_custom_call.1} parent=5 // pred_region
        %s419 = ssub.s32 %s33, 1
        // Predicated region
        $region13: #{tpu_custom_call.1} parent=11 // pred_check
          %p420 = pneg %p106
        $region14: #{tpu_custom_call.1} parent=11 // pred_check_branch
          %422 = sbr.rel (%p420) target = $region16
        $region15: #{tpu_custom_call.1} parent=11 // pred_region
          %s424 = ssub.s32 2048, 2048
          %425 = vsyncadd [#allocation6], %s424
          %s426 = sshll.u32 [#allocation7], 4
          %s427 = int_to_ptr.vmem [resolvable:$true] %s426
          %432 = dma.hbm_to_vmem [thread:$0]  %s2, 2048, %s427, [#allocation6], 128, 128, 8
        $region16: #{tpu_custom_call.1} parent=11 // pred_fallthru
          _
        // Predicated region
        $region17: #{tpu_custom_call.1} parent=11 // pred_check
          %p433 = pneg %p127
        $region18: #{tpu_custom_call.1} parent=11 // pred_check_branch
          %435 = sbr.rel (%p433) target = $region20
        $region19: #{tpu_custom_call.1} parent=11 // pred_region
          _
        $region20: #{tpu_custom_call.1} parent=11 // pred_fallthru
          _
        // Predicated region
        $region21: #{tpu_custom_call.1} parent=11 // pred_check
          %p436 = pneg %p148
        $region22: #{tpu_custom_call.1} parent=11 // pred_check_branch
          %438 = sbr.rel (%p436) target = $region24
        $region23: #{tpu_custom_call.1} parent=11 // pred_region
          %s440 = ssub.s32 1024, 1024
          %441 = vsyncadd [#allocation9], %s440
          %s442 = sshll.u32 [#allocation8], 4
          %s443 = int_to_ptr.vmem [resolvable:$true] %s442
          %448 = dma.hbm_to_vmem [thread:$0]  %s4, 1024, %s443, [#allocation9], 64, 64, 4
        $region24: #{tpu_custom_call.1} parent=11 // pred_fallthru
          _
        // Predicated region
        $region25: #{tpu_custom_call.1} parent=11 // pred_check
          %p449 = pneg %p169
        $region26: #{tpu_custom_call.1} parent=11 // pred_check_branch
          %451 = sbr.rel (%p449) target = $region28
        $region27: #{tpu_custom_call.1} parent=11 // pred_region
          _
        $region28: #{tpu_custom_call.1} parent=11 // pred_fallthru
          _
        // Predicated region
        $region29: #{tpu_custom_call.1} parent=11 // pred_check
          %p452 = pneg %p190
        $region30: #{tpu_custom_call.1} parent=11 // pred_check_branch
          %454 = sbr.rel (%p452) target = $region32
        $region31: #{tpu_custom_call.1} parent=11 // pred_region
          %s456 = ssub.s32 512, 512
          %457 = vsyncadd [#allocation9], %s456
          %s458 = sshll.u32 [#allocation10], 4
          %s459 = int_to_ptr.vmem [resolvable:$true] %s458
          %464 = dma.hbm_to_vmem [thread:$0]  %s6, 512, %s459, [#allocation9], 64, 64, 4
        $region32: #{tpu_custom_call.1} parent=11 // pred_fallthru
          _
        // Predicated region
        $region33: #{tpu_custom_call.1} parent=11 // pred_check
          %p465 = pneg %p211
        $region34: #{tpu_custom_call.1} parent=11 // pred_check_branch
          %467 = sbr.rel (%p465) target = $region36
        $region35: #{tpu_custom_call.1} parent=11 // pred_region
          _
        $region36: #{tpu_custom_call.1} parent=11 // pred_fallthru
          _
        // Predicated region
        $region37: #{tpu_custom_call.1} parent=11 // pred_check
          %p468 = pneg %p232
        $region38: #{tpu_custom_call.1} parent=11 // pred_check_branch
          %470 = sbr.rel (%p468) target = $region40
        $region39: #{tpu_custom_call.1} parent=11 // pred_region
          %s472 = ssub.s32 1024, 1024
          %473 = vsyncadd [#allocation12], %s472
          %s474 = sshll.u32 [#allocation11], 4
          %s475 = int_to_ptr.vmem [resolvable:$true] %s474
          %480 = dma.hbm_to_vmem [thread:$0]  %s8, 1024, %s475, [#allocation12], 64, 64, 4
        $region40: #{tpu_custom_call.1} parent=11 // pred_fallthru
          _
        // Predicated region
        $region41: #{tpu_custom_call.1} parent=11 // pred_check
          %p481 = pneg %p253
        $region42: #{tpu_custom_call.1} parent=11 // pred_check_branch
          %483 = sbr.rel (%p481) target = $region44
        $region43: #{tpu_custom_call.1} parent=11 // pred_region
          _
        $region44: #{tpu_custom_call.1} parent=11 // pred_fallthru
          _
        // Predicated region
        $region45: #{tpu_custom_call.1} parent=11 // pred_check
          %p484 = pneg %p274
        $region46: #{tpu_custom_call.1} parent=11 // pred_check_branch
          %486 = sbr.rel (%p484) target = $region48
        $region47: #{tpu_custom_call.1} parent=11 // pred_region
          %s488 = ssub.s32 1024, 1024
          %489 = vsyncadd [#allocation12], %s488
          %s490 = sshll.u32 [#allocation13], 4
          %s491 = int_to_ptr.vmem [resolvable:$true] %s490
          %496 = dma.hbm_to_vmem [thread:$0]  %s10, 1024, %s491, [#allocation12], 64, 64, 4
        $region48: #{tpu_custom_call.1} parent=11 // pred_fallthru
          _
        // Predicated region
        $region49: #{tpu_custom_call.1} parent=11 // pred_check
          %p497 = pneg %p295
        $region50: #{tpu_custom_call.1} parent=11 // pred_check_branch
          %499 = sbr.rel (%p497) target = $region52
        $region51: #{tpu_custom_call.1} parent=11 // pred_region
          _
        $region52: #{tpu_custom_call.1} parent=11 // pred_fallthru
          _
        // Predicated region
        $region53: #{tpu_custom_call.1} parent=11 // pred_check
          %p500 = pneg %p316
        $region54: #{tpu_custom_call.1} parent=11 // pred_check_branch
          %502 = sbr.rel (%p500) target = $region56
        $region55: #{tpu_custom_call.1} parent=11 // pred_region
          _
        $region56: #{tpu_custom_call.1} parent=11 // pred_fallthru
          _
        // Predicated region
        $region57: #{tpu_custom_call.1} parent=11 // pred_check
          %p503 = pneg %p337
        $region58: #{tpu_custom_call.1} parent=11 // pred_check_branch
          %505 = sbr.rel (%p503) target = $region60
        $region59: #{tpu_custom_call.1} parent=11 // pred_region
          _
        $region60: #{tpu_custom_call.1} parent=11 // pred_fallthru
          _
        // Predicated region
        $region61: #{tpu_custom_call.1} parent=11 // pred_check
          %p506 = pneg %p358
        $region62: #{tpu_custom_call.1} parent=11 // pred_check_branch
          %508 = sbr.rel (%p506) target = $region64
        $region63: #{tpu_custom_call.1} parent=11 // pred_region
          _
        $region64: #{tpu_custom_call.1} parent=11 // pred_fallthru
          _
        // Predicated region
        $region65: #{tpu_custom_call.1} parent=11 // pred_check
          %p509 = pneg %p379
        $region66: #{tpu_custom_call.1} parent=11 // pred_check_branch
          %511 = sbr.rel (%p509) target = $region68
        $region67: #{tpu_custom_call.1} parent=11 // pred_region
          _
        $region68: #{tpu_custom_call.1} parent=11 // pred_fallthru
          _
      $region12: #{tpu_custom_call.1} parent=5 // pred_fallthru
        _
      %p512 = scmp.lt.s32.totalorder %s33, 2
      // Predicated region
      $region69: #{tpu_custom_call.1} parent=5 // pred_check
        %p513 = pneg %p512
      $region70: #{tpu_custom_call.1} parent=5 // pred_check_branch
        %515 = sbr.rel (%p513) target = $region72
      $region71: #{tpu_custom_call.1} parent=5 // pred_region
        // Predicated region
        $region73: #{tpu_custom_call.1} parent=71 // pred_check
          %p516 = pneg %p53
        $region74: #{tpu_custom_call.1} parent=71 // pred_check_branch
          %518 = sbr.rel (%p516) target = $region76
        $region75: #{tpu_custom_call.1} parent=71 // pred_region
          %s519 = sand.u32 %s43, 1
          %s520 = scalar_lea.sflag [#allocation3], %s519
          %s521 = sand.u32 %s43, 1
          %s522 = smul.addr %s521, 16
          %s523 = scalar_lea.vmem [#allocation2], %s522
          %s525 = ssub.s32 256, 256
          %526 = vsyncadd %s520, %s525
          %s527 = smul.addr %s33, 2
          %s528 = smul.addr %s527, 128
          %s529 = scalar_lea.hbm %s0, %s528
          %s530 = sshll.u32 %s523, 4
          %s531 = int_to_ptr.vmem [resolvable:$true] %s530
          %536 = dma.hbm_to_vmem [thread:$0]  %s529, 256, %s531, %s520, 128, 128, 8
        $region76: #{tpu_custom_call.1} parent=71 // pred_fallthru
          _
        // Predicated region
        $region77: #{tpu_custom_call.1} parent=71 // pred_check
          %p537 = pneg %p79
        $region78: #{tpu_custom_call.1} parent=71 // pred_check_branch
          %539 = sbr.rel (%p537) target = $region80
        $region79: #{tpu_custom_call.1} parent=71 // pred_region
          %s540 = sand.u32 %s33, 1
          %s541 = scalar_lea.sflag [#allocation6], %s540
          %s542 = sand.u32 %s69, 1
          %s543 = smul.addr %s542, 8
          %s544 = scalar_lea.vmem [#allocation5], %s543
          %s546 = ssub.s32 128, 128
          %547 = vsyncadd %s541, %s546
          %s548 = smul.addr %s33, 2
          %s549 = smul.addr %s548, 64
          %s550 = scalar_lea.hbm %s1, %s549
          %s551 = sshll.u32 %s544, 4
          %s552 = int_to_ptr.vmem [resolvable:$true] %s551
          %557 = dma.hbm_to_vmem [thread:$0]  %s550, 128, %s552, %s541, 64, 64, 4
        $region80: #{tpu_custom_call.1} parent=71 // pred_fallthru
          _
      $region72: #{tpu_custom_call.1} parent=5 // pred_fallthru
        _
      %p558 = scmp.le.s32.totalorder 1, %s33
      %p559 = scmp.lt.s32.totalorder %s33, 3
      %p560 = pnand %p558, %p559
      %p561 = pneg %p560
      // Predicated region
      $region81: #{tpu_custom_call.1} parent=5 // pred_check
        _
      $region82: #{tpu_custom_call.1} parent=5 // pred_check_branch
        %563 = sbr.rel (%p560) target = $region84
      $region83: #{tpu_custom_call.1} parent=5 // pred_region
        %s564 = ssub.s32 %s33, 1
        %s565 = sand.u32 %s46, 1
        %s566 = scalar_lea.sflag [#allocation3], %s565
        %s567 = sand.u32 %s46, 1
        %s568 = smul.addr %s567, 16
        %s569 = scalar_lea.vmem [#allocation2], %s568
        // Predicated region
        $region85: #{tpu_custom_call.1} parent=83 // pred_check
          %p570 = pneg %p59
        $region86: #{tpu_custom_call.1} parent=83 // pred_check_branch
          %572 = sbr.rel (%p570) target = $region88
        $region87: #{tpu_custom_call.1} parent=83 // pred_region
          %573 = dma.done %s566, 256
        $region88: #{tpu_custom_call.1} parent=83 // pred_fallthru
          _
        %s574 = sand.u32 %s38, 1
        %s575 = scalar_lea.sflag [#allocation6], %s574
        %s576 = sand.u32 %s72, 1
        %s577 = smul.addr %s576, 8
        %s578 = scalar_lea.vmem [#allocation5], %s577
        // Predicated region
        $region89: #{tpu_custom_call.1} parent=83 // pred_check
          %p579 = pneg %p85
        $region90: #{tpu_custom_call.1} parent=83 // pred_check_branch
          %581 = sbr.rel (%p579) target = $region92
        $region91: #{tpu_custom_call.1} parent=83 // pred_region
          %582 = dma.done %s575, 128
        $region92: #{tpu_custom_call.1} parent=83 // pred_fallthru
          _
        // Predicated region
        $region93: #{tpu_custom_call.1} parent=83 // pred_check
          %p583 = pneg %p106
        $region94: #{tpu_custom_call.1} parent=83 // pred_check_branch
          %585 = sbr.rel (%p583) target = $region96
        $region95: #{tpu_custom_call.1} parent=83 // pred_region
          %586 = dma.done [#allocation6], 2048
        $region96: #{tpu_custom_call.1} parent=83 // pred_fallthru
          _
        // Predicated region
        $region97: #{tpu_custom_call.1} parent=83 // pred_check
          %p587 = pneg %p148
        $region98: #{tpu_custom_call.1} parent=83 // pred_check_branch
          %589 = sbr.rel (%p587) target = $region100
        $region99: #{tpu_custom_call.1} parent=83 // pred_region
          %590 = dma.done [#allocation9], 1024
        $region100: #{tpu_custom_call.1} parent=83 // pred_fallthru
          _
        // Predicated region
        $region101: #{tpu_custom_call.1} parent=83 // pred_check
          %p591 = pneg %p190
        $region102: #{tpu_custom_call.1} parent=83 // pred_check_branch
          %593 = sbr.rel (%p591) target = $region104
        $region103: #{tpu_custom_call.1} parent=83 // pred_region
          %594 = dma.done [#allocation9], 512
        $region104: #{tpu_custom_call.1} parent=83 // pred_fallthru
          _
        // Predicated region
        $region105: #{tpu_custom_call.1} parent=83 // pred_check
          %p595 = pneg %p232
        $region106: #{tpu_custom_call.1} parent=83 // pred_check_branch
          %597 = sbr.rel (%p595) target = $region108
        $region107: #{tpu_custom_call.1} parent=83 // pred_region
          %598 = dma.done [#allocation12], 1024
        $region108: #{tpu_custom_call.1} parent=83 // pred_fallthru
          _
        // Predicated region
        $region109: #{tpu_custom_call.1} parent=83 // pred_check
          %p599 = pneg %p274
        $region110: #{tpu_custom_call.1} parent=83 // pred_check_branch
          %601 = sbr.rel (%p599) target = $region112
        $region111: #{tpu_custom_call.1} parent=83 // pred_region
          %602 = dma.done [#allocation12], 1024
        $region112: #{tpu_custom_call.1} parent=83 // pred_fallthru
          _
        %s603 = sand.u32 %s46, 1
        %s604 = scalar_lea.sflag [#allocation3], %s603
        %s605 = sand.u32 %s46, 1
        %s606 = smul.addr %s605, 16
        %s607 = scalar_lea.vmem [#allocation2], %s606
        %p608 = pneg %p59
        %p609 = pneg %p56
        %s610 = sand.u32 %s38, 1
        %s611 = scalar_lea.sflag [#allocation6], %s610
        %s612 = sand.u32 %s72, 1
        %s613 = smul.addr %s612, 8
        %s614 = scalar_lea.vmem [#allocation5], %s613
        %p615 = pneg %p85
        %p616 = pneg %p82
        %p617 = pneg %p106
        %p618 = pneg %p103
        %p619 = pneg %p127
        %p620 = pneg %p124
        %p621 = pneg %p148
        %p622 = pneg %p145
        %p623 = pneg %p169
        %p624 = pneg %p166
        %p625 = pneg %p190
        %p626 = pneg %p187
        %p627 = pneg %p211
        %p628 = pneg %p208
        %p629 = pneg %p232
        %p630 = pneg %p229
        %p631 = pneg %p253
        %p632 = pneg %p250
        %p633 = pneg %p274
        %p634 = pneg %p271
        %p635 = pneg %p295
        %p636 = pneg %p292
        %p637 = pneg %p316
        %p638 = pneg %p313
        %p639 = pneg %p337
        %p640 = pneg %p334
        %p641 = pneg %p358
        %p642 = pneg %p355
        %p643 = pneg %p379
        %p644 = pneg %p376
        %p645 = pneg %p405
        %p646 = pneg %p402
        %s647 = sand.u32 %s392, 1
        %s648 = scalar_lea.sflag [#allocation4], %s647
        %s649 = sand.u32 %s392, 1
        %s650 = smul.addr %s649, 16
        %s651 = scalar_lea.vmem [#allocation14], %s650
        %v653 = vld [vmem:[%s569] sm:$0xff]
        %v654 = vld [vmem:[%s569 + $0x8] sm:$0xff]
        %v655 = vld [vmem:[%s578] sm:$0xf]
        %v656 = vld [vmem:[%s578 + $0x4] sm:$0xf]
        %v657 = vunpack.c.l.bf16 %v655
        %v658 = vunpack.c.l.bf16 %v656
        %v659 = vadd.f32 %v653, %v657
        %v660 = vadd.f32 %v654, %v658
        %v661 = vpack.c.bf16 %v660, %v659
        %v662 = vpack.c.bf16 %v654, %v653
        %v663 = vld [vmem:[#allocation7] sm:$0xff]
        %v664 = vld [vmem:[#allocation7 + $0x8] sm:$0xff]
        %v665 = vld [vmem:[#allocation7 + $0x10] sm:$0xff]
        %v666 = vld [vmem:[#allocation7 + $0x18] sm:$0xff]
        %v667 = vld [vmem:[#allocation7 + $0x20] sm:$0xff]
        %v668 = vld [vmem:[#allocation7 + $0x28] sm:$0xff]
        %v669 = vld [vmem:[#allocation7 + $0x30] sm:$0xff]
        %v670 = vld [vmem:[#allocation7 + $0x38] sm:$0xff]
        %v671 = vld [vmem:[#allocation7 + $0x40] sm:$0xff]
        %v672 = vld [vmem:[#allocation7 + $0x48] sm:$0xff]
        %v673 = vld [vmem:[#allocation7 + $0x50] sm:$0xff]
        %v674 = vld [vmem:[#allocation7 + $0x58] sm:$0xff]
        %v675 = vld [vmem:[#allocation7 + $0x60] sm:$0xff]
        %v676 = vld [vmem:[#allocation7 + $0x68] sm:$0xff]
        %v677 = vld [vmem:[#allocation7 + $0x70] sm:$0xff]
        %v678 = vld [vmem:[#allocation7 + $0x78] sm:$0xff]
        %v679 = vld [vmem:[%s3] sm:$0x3]
        %v681 = vlaneseq
        %v682 = vshrl.u32 %v681, 7
        %v683 = vsub.s32 0, %v682
        %v684 = vrot.slane %v679, %v683
        %v685 = vlaneseq
        %v686 = vshrl.u32 %v685, 7
        %v687 = vsub.s32 1, %v686
        %v688 = vrot.slane %v679, %v687
        %v707 = vunpack.c.l.b16 %v663
        %v708 = vunpack.c.h.b16 %v663
        %v709 = vunpack.c.l.b16 %v664
        %v710 = vunpack.c.h.b16 %v664
        %v711 = vunpack.c.l.b16 %v665
        %v712 = vunpack.c.h.b16 %v665
        %v713 = vunpack.c.l.b16 %v666
        %v714 = vunpack.c.h.b16 %v666
        %v715 = vunpack.c.l.b16 %v667
        %v716 = vunpack.c.h.b16 %v667
        %v717 = vunpack.c.l.b16 %v668
        %v718 = vunpack.c.h.b16 %v668
        %v719 = vunpack.c.l.b16 %v669
        %v720 = vunpack.c.h.b16 %v669
        %v721 = vunpack.c.l.b16 %v670
        %v722 = vunpack.c.h.b16 %v670
        %v723 = vunpack.c.l.b16 %v671
        %v724 = vunpack.c.h.b16 %v671
        %v725 = vunpack.c.l.b16 %v672
        %v726 = vunpack.c.h.b16 %v672
        %v727 = vunpack.c.l.b16 %v673
        %v728 = vunpack.c.h.b16 %v673
        %v729 = vunpack.c.l.b16 %v674
        %v730 = vunpack.c.h.b16 %v674
        %v731 = vunpack.c.l.b16 %v675
        %v732 = vunpack.c.h.b16 %v675
        %v733 = vunpack.c.l.b16 %v676
        %v734 = vunpack.c.h.b16 %v676
        %v735 = vunpack.c.l.b16 %v677
        %v736 = vunpack.c.h.b16 %v677
        %v737 = vunpack.c.l.b16 %v678
        %v738 = vunpack.c.h.b16 %v678
        %v739 = vpack.c.b16 %v709, %v707
        %v740 = vpack.c.b16 %v710, %v708
        %v741 = vpack.c.b16 %v713, %v711
        %v742 = vpack.c.b16 %v714, %v712
        %v743 = vpack.c.b16 %v717, %v715
        %v744 = vpack.c.b16 %v718, %v716
        %v745 = vpack.c.b16 %v721, %v719
        %v746 = vpack.c.b16 %v722, %v720
        %v747 = vpack.c.b16 %v725, %v723
        %v748 = vpack.c.b16 %v726, %v724
        %v749 = vpack.c.b16 %v729, %v727
        %v750 = vpack.c.b16 %v730, %v728
        %v751 = vpack.c.b16 %v733, %v731
        %v752 = vpack.c.b16 %v734, %v732
        %v753 = vpack.c.b16 %v737, %v735
        %v754 = vpack.c.b16 %v738, %v736
        %771 = vmatprep.subr.bf16.mxu0 %v740
        %772 = vmatpush1.bf16.msra.mxu0 %v739
        %773 = vmatprep.subr.bf16.mxu0 %v742
        %774 = vmatpush1.bf16.msra.mxu0 %v741
        %775 = vmatprep.subr.bf16.mxu0 %v744
        %776 = vmatpush1.bf16.msra.mxu0 %v743
        %777 = vmatprep.subr.bf16.mxu0 %v746
        %778 = vmatpush1.bf16.msra.mxu0 %v745
        %779 = vmatprep.subr.bf16.mxu0 %v748
        %780 = vmatpush1.bf16.msra.mxu0 %v747
        %781 = vmatprep.subr.bf16.mxu0 %v750
        %782 = vmatpush1.bf16.msra.mxu0 %v749
        %783 = vmatprep.subr.bf16.mxu0 %v752
        %784 = vmatpush1.bf16.msra.mxu0 %v751
        %785 = vmatprep.subr.bf16.mxu0 %v754
        %786 = vmatpush1.bf16.msra.mxu0 %v753
        %787 = vmatprep.subr.bf16.mxu0 0
        %788 = vmatpush1.bf16.msra.mxu0 0
        %789 = vmatprep.subr.bf16.mxu0 0
        %790 = vmatpush1.bf16.msra.mxu0 0
        %791 = vmatprep.subr.bf16.mxu0 0
        %792 = vmatpush1.bf16.msra.mxu0 0
        %793 = vmatprep.subr.bf16.mxu0 0
        %794 = vmatpush1.bf16.msra.mxu0 0
        %795 = vmatprep.subr.bf16.mxu0 0
        %796 = vmatpush1.bf16.msra.mxu0 0
        %797 = vmatprep.subr.bf16.mxu0 0
        %798 = vmatpush1.bf16.msra.mxu0 0
        %799 = vmatprep.subr.bf16.mxu0 0
        %800 = vmatpush1.bf16.msra.mxu0 0
        %801 = vmatprep.subr.bf16.mxu0 0
        %802 = vmatpush1.bf16.msra.mxu0 0
        %803 = vmatprep.mubr.bf16.mxu0 0
        %804 = vmatmul.mubr.bf16.gmra.mrb[0].mxu0 %v661
        %v805 = vpop.f32.mrb[0].mxu0
        %v806 = vadd.f32 %v684, %v805
        %v807 = vpop.f32.mrb[0].mxu0
        %v808 = vadd.f32 %v688, %v807
        %v809 = vpop.f32.mrb[0].mxu0
        %v810 = vadd.f32 %v684, %v809
        %v811 = vpop.f32.mrb[0].mxu0
        %v812 = vadd.f32 %v688, %v811
        %813 = vdwg.mxu0
        %v814 = vld [vmem:[#allocation8] sm:$0xf]
        %v815 = vld [vmem:[#allocation8 + $0x4] sm:$0xf]
        %v816 = vld [vmem:[#allocation8 + $0x8] sm:$0xf]
        %v817 = vld [vmem:[#allocation8 + $0xc] sm:$0xf]
        %v818 = vld [vmem:[#allocation8 + $0x10] sm:$0xf]
        %v819 = vld [vmem:[#allocation8 + $0x14] sm:$0xf]
        %v820 = vld [vmem:[#allocation8 + $0x18] sm:$0xf]
        %v821 = vld [vmem:[#allocation8 + $0x1c] sm:$0xf]
        %v822 = vld [vmem:[#allocation8 + $0x20] sm:$0xf]
        %v823 = vld [vmem:[#allocation8 + $0x24] sm:$0xf]
        %v824 = vld [vmem:[#allocation8 + $0x28] sm:$0xf]
        %v825 = vld [vmem:[#allocation8 + $0x2c] sm:$0xf]
        %v826 = vld [vmem:[#allocation8 + $0x30] sm:$0xf]
        %v827 = vld [vmem:[#allocation8 + $0x34] sm:$0xf]
        %v828 = vld [vmem:[#allocation8 + $0x38] sm:$0xf]
        %v829 = vld [vmem:[#allocation8 + $0x3c] sm:$0xf]
        %v830 = vld [vmem:[%s5] sm:$0x1]
        %v832 = vlaneseq
        %v833 = vshrl.u32 %v832, 7
        %v834 = vsub.s32 0, %v833
        %v835 = vrot.slane %v830, %v834
        %v853 = vunpack.c.l.b16 %v814
        %v854 = vunpack.c.l.b16 %v815
        %v855 = vunpack.c.l.b16 %v816
        %v856 = vunpack.c.l.b16 %v817
        %v857 = vunpack.c.l.b16 %v818
        %v858 = vunpack.c.l.b16 %v819
        %v859 = vunpack.c.l.b16 %v820
        %v860 = vunpack.c.l.b16 %v821
        %v861 = vunpack.c.l.b16 %v822
        %v862 = vunpack.c.l.b16 %v823
        %v863 = vunpack.c.l.b16 %v824
        %v864 = vunpack.c.l.b16 %v825
        %v865 = vunpack.c.l.b16 %v826
        %v866 = vunpack.c.l.b16 %v827
        %v867 = vunpack.c.l.b16 %v828
        %v868 = vunpack.c.l.b16 %v829
        %v869 = vpack.c.b16 %v854, %v853
        %v870 = vpack.c.b16 %v856, %v855
        %v871 = vpack.c.b16 %v858, %v857
        %v872 = vpack.c.b16 %v860, %v859
        %v873 = vpack.c.b16 %v862, %v861
        %v874 = vpack.c.b16 %v864, %v863
        %v875 = vpack.c.b16 %v866, %v865
        %v876 = vpack.c.b16 %v868, %v867
        %885 = vmatprep.subr.bf16.mxu0 0
        %886 = vmatpush1.bf16.msra.mxu0 %v869
        %887 = vmatprep.subr.bf16.mxu0 0
        %888 = vmatpush1.bf16.msra.mxu0 %v870
        %889 = vmatprep.subr.bf16.mxu0 0
        %890 = vmatpush1.bf16.msra.mxu0 %v871
        %891 = vmatprep.subr.bf16.mxu0 0
        %892 = vmatpush1.bf16.msra.mxu0 %v872
        %893 = vmatprep.subr.bf16.mxu0 0
        %894 = vmatpush1.bf16.msra.mxu0 %v873
        %895 = vmatprep.subr.bf16.mxu0 0
        %896 = vmatpush1.bf16.msra.mxu0 %v874
        %897 = vmatprep.subr.bf16.mxu0 0
        %898 = vmatpush1.bf16.msra.mxu0 %v875
        %899 = vmatprep.subr.bf16.mxu0 0
        %900 = vmatpush1.bf16.msra.mxu0 %v876
        %901 = vmatprep.subr.bf16.mxu0 0
        %902 = vmatpush1.bf16.msra.mxu0 0
        %903 = vmatprep.subr.bf16.mxu0 0
        %904 = vmatpush1.bf16.msra.mxu0 0
        %905 = vmatprep.subr.bf16.mxu0 0
        %906 = vmatpush1.bf16.msra.mxu0 0
        %907 = vmatprep.subr.bf16.mxu0 0
        %908 = vmatpush1.bf16.msra.mxu0 0
        %909 = vmatprep.subr.bf16.mxu0 0
        %910 = vmatpush1.bf16.msra.mxu0 0
        %911 = vmatprep.subr.bf16.mxu0 0
        %912 = vmatpush1.bf16.msra.mxu0 0
        %913 = vmatprep.subr.bf16.mxu0 0
        %914 = vmatpush1.bf16.msra.mxu0 0
        %915 = vmatprep.subr.bf16.mxu0 0
        %916 = vmatpush1.bf16.msra.mxu0 0
        %917 = vmatprep.mubr.bf16.mxu0 0
        %918 = vmatmul.mubr.bf16.gmra.mrb[0].mxu0 %v662
        %v919 = vpop.f32.mrb[0].mxu0
        %v920 = vadd.f32 %v835, %v919
        %v921 = vpop.f32.mrb[0].mxu0
        %v922 = vpop.f32.mrb[0].mxu0
        %v923 = vadd.f32 %v835, %v922
        %v924 = vpop.f32.mrb[0].mxu0
        %925 = vdwg.mxu0
        %v926 = vpack.c.bf16 %v810, %v806
        %v927 = vpack.c.bf16 %v812, %v808
        %v928 = vpack.c.bf16 %v923, %v920
        %vm929 = vcmask 130048
        %v931 = vsel %vm929, %v926, 0
        %v934 = vsel %vm929, %v927, 0
        %936 = vmatprep.subr.bf16.mxu0 0
        %937 = vmatpush1.bf16.xpose.msra.mxu0 %v934
        %938 = vmatprep.subr.bf16.mxu0 0
        %939 = vmatpush1.bf16.xpose.msra.mxu0 0
        %940 = vmatprep.subr.bf16.mxu0 0
        %941 = vmatpush1.bf16.xpose.msra.mxu0 0
        %942 = vmatprep.subr.bf16.mxu0 0
        %943 = vmatpush1.bf16.xpose.msra.mxu0 0
        %944 = vmatprep.subr.bf16.mxu0 0
        %945 = vmatpush1.bf16.xpose.msra.mxu0 0
        %946 = vmatprep.subr.bf16.mxu0 0
        %947 = vmatpush1.bf16.xpose.msra.mxu0 0
        %948 = vmatprep.subr.bf16.mxu0 0
        %949 = vmatpush1.bf16.xpose.msra.mxu0 0
        %950 = vmatprep.subr.bf16.mxu0 0
        %951 = vmatpush1.bf16.xpose.msra.mxu0 0
        %952 = vmatprep.subr.bf16.mxu0 0
        %953 = vmatpush1.bf16.xpose.msra.mxu0 0
        %954 = vmatprep.subr.bf16.mxu0 0
        %955 = vmatpush1.bf16.xpose.msra.mxu0 0
        %956 = vmatprep.subr.bf16.mxu0 0
        %957 = vmatpush1.bf16.xpose.msra.mxu0 0
        %958 = vmatprep.subr.bf16.mxu0 0
        %959 = vmatpush1.bf16.xpose.msra.mxu0 0
        %960 = vmatprep.subr.bf16.mxu0 0
        %961 = vmatpush1.bf16.xpose.msra.mxu0 0
        %962 = vmatprep.subr.bf16.mxu0 0
        %963 = vmatpush1.bf16.xpose.msra.mxu0 0
        %964 = vmatprep.subr.bf16.mxu0 0
        %965 = vmatpush1.bf16.xpose.msra.mxu0 0
        %966 = vmatprep.subr.bf16.mxu0 0
        %967 = vmatpush1.bf16.xpose.msra.mxu0 0
        %968 = vmatprep.mubr.bf16.mxu0 0
        %969 = vmatmul.mubr.bf16.gmra.mrb[0].mxu0 %v931
        %v970 = vpop.f32.mrb[0].mxu0
        %v971 = vadd.f32 0.0, %v970
        %v972 = vpop.f32.mrb[0].mxu0
        %v973 = vpop.f32.mrb[0].mxu0
        %v974 = vadd.f32 0.0, %v973
        %v975 = vpop.f32.mrb[0].mxu0
        %976 = vdwg.mxu0
        %v977 = vsel %vm929, %v971, -inf
        %978 = vmax.xlane.f32.xlu0 %v977
        %v979 = vpop.xlane.xlu0 %978
        %v980 = vsel %vm929, %v974, -inf
        %981 = vmax.xlane.f32.xlu0 %v980
        %v982 = vpop.xlane.xlu0 %981
        %v983 = vsub.f32 %v971, %v979
        %v984 = vsub.f32 %v974, %v982
        %v985 = vmul.f32 %v983, 1.442695
        %v986 = vpow.pop %v985
        %v987 = vmul.f32 %v984, 1.442695
        %v988 = vpow.pop %v987
        %v989 = vsel %vm929, %v986, 0.0
        %990 = vadd.xlane.f32.xlu0 %v989
        %v991 = vpop.xlane.xlu0 %990
        %v992 = vsel %vm929, %v988, 0.0
        %993 = vadd.xlane.f32.xlu0 %v992
        %v994 = vpop.xlane.xlu0 %993
        %v995 = vpack.c.bf16 %v988, %v986
        %v997 = vsel %vm929, %v995, 0
        %999 = vmatprep.subr.bf16.mxu0 0
        %1000 = vmatpush1.bf16.msra.mxu0 %v928
        %1001 = vmatprep.subr.bf16.mxu0 0
        %1002 = vmatpush1.bf16.msra.mxu0 0
        %1003 = vmatprep.subr.bf16.mxu0 0
        %1004 = vmatpush1.bf16.msra.mxu0 0
        %1005 = vmatprep.subr.bf16.mxu0 0
        %1006 = vmatpush1.bf16.msra.mxu0 0
        %1007 = vmatprep.subr.bf16.mxu0 0
        %1008 = vmatpush1.bf16.msra.mxu0 0
        %1009 = vmatprep.subr.bf16.mxu0 0
        %1010 = vmatpush1.bf16.msra.mxu0 0
        %1011 = vmatprep.subr.bf16.mxu0 0
        %1012 = vmatpush1.bf16.msra.mxu0 0
        %1013 = vmatprep.subr.bf16.mxu0 0
        %1014 = vmatpush1.bf16.msra.mxu0 0
        %1015 = vmatprep.subr.bf16.mxu0 0
        %1016 = vmatpush1.bf16.msra.mxu0 0
        %1017 = vmatprep.subr.bf16.mxu0 0
        %1018 = vmatpush1.bf16.msra.mxu0 0
        %1019 = vmatprep.subr.bf16.mxu0 0
        %1020 = vmatpush1.bf16.msra.mxu0 0
        %1021 = vmatprep.subr.bf16.mxu0 0
        %1022 = vmatpush1.bf16.msra.mxu0 0
        %1023 = vmatprep.subr.bf16.mxu0 0
        %1024 = vmatpush1.bf16.msra.mxu0 0
        %1025 = vmatprep.subr.bf16.mxu0 0
        %1026 = vmatpush1.bf16.msra.mxu0 0
        %1027 = vmatprep.subr.bf16.mxu0 0
        %1028 = vmatpush1.bf16.msra.mxu0 0
        %1029 = vmatprep.subr.bf16.mxu0 0
        %1030 = vmatpush1.bf16.msra.mxu0 0
        %1031 = vmatprep.mubr.bf16.mxu0 0
        %1032 = vmatmul.mubr.bf16.gmra.mrb[0].mxu0 %v997
        %v1033 = vpop.f32.mrb[0].mxu0
        %v1034 = vadd.f32 0.0, %v1033
        %v1035 = vpop.f32.mrb[0].mxu0
        %v1036 = vpop.f32.mrb[0].mxu0
        %v1037 = vadd.f32 0.0, %v1036
        %v1038 = vpop.f32.mrb[0].mxu0
        %1039 = vdwg.mxu0
        %v1040 = vrcp.pop %v991
        %v1041 = vmul.f32 1.0, %v1040
        %v1042 = vrcp.pop %v994
        %v1043 = vmul.f32 1.0, %v1042
        %v1044 = vmul.f32 %v1034, %v1041
        %v1045 = vmul.f32 %v1037, %v1043
        %v1046 = vpack.c.bf16 %v1045, %v1044
        %v1047 = vld [vmem:[#allocation10] sm:$0xf]
        %v1048 = vld [vmem:[#allocation10 + $0x4] sm:$0xf]
        %1050 = vrot.lane.b32.xlu0 %v926, 112
        %v1051 = vpop.permute.xlu0 %1050
        %1053 = vrot.lane.b32.xlu0 %v927, 112
        %v1054 = vpop.permute.xlu0 %1053
        %v1056 = vsel %vm929, %v1051, 0
        %v1059 = vsel %vm929, %v1054, 0
        %1061 = vmatprep.subr.bf16.mxu0 0
        %1062 = vmatpush1.bf16.xpose.msra.mxu0 %v1059
        %1063 = vmatprep.subr.bf16.mxu0 0
        %1064 = vmatpush1.bf16.xpose.msra.mxu0 0
        %1065 = vmatprep.subr.bf16.mxu0 0
        %1066 = vmatpush1.bf16.xpose.msra.mxu0 0
        %1067 = vmatprep.subr.bf16.mxu0 0
        %1068 = vmatpush1.bf16.xpose.msra.mxu0 0
        %1069 = vmatprep.subr.bf16.mxu0 0
        %1070 = vmatpush1.bf16.xpose.msra.mxu0 0
        %1071 = vmatprep.subr.bf16.mxu0 0
        %1072 = vmatpush1.bf16.xpose.msra.mxu0 0
        %1073 = vmatprep.subr.bf16.mxu0 0
        %1074 = vmatpush1.bf16.xpose.msra.mxu0 0
        %1075 = vmatprep.subr.bf16.mxu0 0
        %1076 = vmatpush1.bf16.xpose.msra.mxu0 0
        %1077 = vmatprep.subr.bf16.mxu0 0
        %1078 = vmatpush1.bf16.xpose.msra.mxu0 0
        %1079 = vmatprep.subr.bf16.mxu0 0
        %1080 = vmatpush1.bf16.xpose.msra.mxu0 0
        %1081 = vmatprep.subr.bf16.mxu0 0
        %1082 = vmatpush1.bf16.xpose.msra.mxu0 0
        %1083 = vmatprep.subr.bf16.mxu0 0
        %1084 = vmatpush1.bf16.xpose.msra.mxu0 0
        %1085 = vmatprep.subr.bf16.mxu0 0
        %1086 = vmatpush1.bf16.xpose.msra.mxu0 0
        %1087 = vmatprep.subr.bf16.mxu0 0
        %1088 = vmatpush1.bf16.xpose.msra.mxu0 0
        %1089 = vmatprep.subr.bf16.mxu0 0
        %1090 = vmatpush1.bf16.xpose.msra.mxu0 0
        %1091 = vmatprep.subr.bf16.mxu0 0
        %1092 = vmatpush1.bf16.xpose.msra.mxu0 0
        %1093 = vmatprep.mubr.bf16.mxu0 0
        %1094 = vmatmul.mubr.bf16.gmra.mrb[0].mxu0 %v1056
        %v1095 = vpop.f32.mrb[0].mxu0
        %v1096 = vadd.f32 0.0, %v1095
        %v1097 = vpop.f32.mrb[0].mxu0
        %v1098 = vpop.f32.mrb[0].mxu0
        %v1099 = vadd.f32 0.0, %v1098
        %v1100 = vpop.f32.mrb[0].mxu0
        %1101 = vdwg.mxu0
        %v1102 = vsel %vm929, %v1096, -inf
        %1103 = vmax.xlane.f32.xlu0 %v1102
        %v1104 = vpop.xlane.xlu0 %1103
        %v1105 = vsel %vm929, %v1099, -inf
        %1106 = vmax.xlane.f32.xlu0 %v1105
        %v1107 = vpop.xlane.xlu0 %1106
        %v1108 = vsub.f32 %v1096, %v1104
        %v1109 = vsub.f32 %v1099, %v1107
        %v1110 = vmul.f32 %v1108, 1.442695
        %v1111 = vpow.pop %v1110
        %v1112 = vmul.f32 %v1109, 1.442695
        %v1113 = vpow.pop %v1112
        %v1114 = vsel %vm929, %v1111, 0.0
        %1115 = vadd.xlane.f32.xlu0 %v1114
        %v1116 = vpop.xlane.xlu0 %1115
        %v1117 = vsel %vm929, %v1113, 0.0
        %1118 = vadd.xlane.f32.xlu0 %v1117
        %v1119 = vpop.xlane.xlu0 %1118
        %v1120 = vpack.c.bf16 %v1113, %v1111
        %1122 = vrot.lane.b32.xlu0 %v928, 112
        %v1123 = vpop.permute.xlu0 %1122
        %v1126 = vsel %vm929, %v1120, 0
        %1128 = vmatprep.subr.bf16.mxu0 0
        %1129 = vmatpush1.bf16.msra.mxu0 %v1123
        %1130 = vmatprep.subr.bf16.mxu0 0
        %1131 = vmatpush1.bf16.msra.mxu0 0
        %1132 = vmatprep.subr.bf16.mxu0 0
        %1133 = vmatpush1.bf16.msra.mxu0 0
        %1134 = vmatprep.subr.bf16.mxu0 0
        %1135 = vmatpush1.bf16.msra.mxu0 0
        %1136 = vmatprep.subr.bf16.mxu0 0
        %1137 = vmatpush1.bf16.msra.mxu0 0
        %1138 = vmatprep.subr.bf16.mxu0 0
        %1139 = vmatpush1.bf16.msra.mxu0 0
        %1140 = vmatprep.subr.bf16.mxu0 0
        %1141 = vmatpush1.bf16.msra.mxu0 0
        %1142 = vmatprep.subr.bf16.mxu0 0
        %1143 = vmatpush1.bf16.msra.mxu0 0
        %1144 = vmatprep.subr.bf16.mxu0 0
        %1145 = vmatpush1.bf16.msra.mxu0 0
        %1146 = vmatprep.subr.bf16.mxu0 0
        %1147 = vmatpush1.bf16.msra.mxu0 0
        %1148 = vmatprep.subr.bf16.mxu0 0
        %1149 = vmatpush1.bf16.msra.mxu0 0
        %1150 = vmatprep.subr.bf16.mxu0 0
        %1151 = vmatpush1.bf16.msra.mxu0 0
        %1152 = vmatprep.subr.bf16.mxu0 0
        %1153 = vmatpush1.bf16.msra.mxu0 0
        %1154 = vmatprep.subr.bf16.mxu0 0
        %1155 = vmatpush1.bf16.msra.mxu0 0
        %1156 = vmatprep.subr.bf16.mxu0 0
        %1157 = vmatpush1.bf16.msra.mxu0 0
        %1158 = vmatprep.subr.bf16.mxu0 0
        %1159 = vmatpush1.bf16.msra.mxu0 0
        %1160 = vmatprep.mubr.bf16.mxu0 0
        %1161 = vmatmul.mubr.bf16.gmra.mrb[0].mxu0 %v1126
        %v1162 = vpop.f32.mrb[0].mxu0
        %v1163 = vadd.f32 0.0, %v1162
        %v1164 = vpop.f32.mrb[0].mxu0
        %v1165 = vpop.f32.mrb[0].mxu0
        %v1166 = vadd.f32 0.0, %v1165
        %v1167 = vpop.f32.mrb[0].mxu0
        %1168 = vdwg.mxu0
        %v1169 = vrcp.pop %v1116
        %v1170 = vmul.f32 1.0, %v1169
        %v1171 = vrcp.pop %v1119
        %v1172 = vmul.f32 1.0, %v1171
        %v1173 = vmul.f32 %v1163, %v1170
        %v1174 = vmul.f32 %v1166, %v1172
        %v1175 = vpack.c.bf16 %v1174, %v1173
        %s1176 = scalar_lea.vmem [#allocation10], 8
        %v1177 = vld [vmem:[%s1176] sm:$0xf]
        %v1178 = vld [vmem:[%s1176 + $0x4] sm:$0xf]
        %v1181 = vunpack.c.l.b16 %v1177
        %v1182 = vunpack.c.l.b16 %v1178
        %v1183 = vpack.c.b16 %v1182, %v1181
        %v1186 = vsel %vm929, %v1175, 0
        %1188 = vmatprep.subr.bf16.mxu0 0
        %1189 = vmatpush1.bf16.msra.mxu0 %v1183
        %1190 = vmatprep.subr.bf16.mxu0 0
        %1191 = vmatpush1.bf16.msra.mxu0 0
        %1192 = vmatprep.subr.bf16.mxu0 0
        %1193 = vmatpush1.bf16.msra.mxu0 0
        %1194 = vmatprep.subr.bf16.mxu0 0
        %1195 = vmatpush1.bf16.msra.mxu0 0
        %1196 = vmatprep.subr.bf16.mxu0 0
        %1197 = vmatpush1.bf16.msra.mxu0 0
        %1198 = vmatprep.subr.bf16.mxu0 0
        %1199 = vmatpush1.bf16.msra.mxu0 0
        %1200 = vmatprep.subr.bf16.mxu0 0
        %1201 = vmatpush1.bf16.msra.mxu0 0
        %1202 = vmatprep.subr.bf16.mxu0 0
        %1203 = vmatpush1.bf16.msra.mxu0 0
        %1204 = vmatprep.subr.bf16.mxu0 0
        %1205 = vmatpush1.bf16.msra.mxu0 0
        %1206 = vmatprep.subr.bf16.mxu0 0
        %1207 = vmatpush1.bf16.msra.mxu0 0
        %1208 = vmatprep.subr.bf16.mxu0 0
        %1209 = vmatpush1.bf16.msra.mxu0 0
        %1210 = vmatprep.subr.bf16.mxu0 0
        %1211 = vmatpush1.bf16.msra.mxu0 0
        %1212 = vmatprep.subr.bf16.mxu0 0
        %1213 = vmatpush1.bf16.msra.mxu0 0
        %1214 = vmatprep.subr.bf16.mxu0 0
        %1215 = vmatpush1.bf16.msra.mxu0 0
        %1216 = vmatprep.subr.bf16.mxu0 0
        %1217 = vmatpush1.bf16.msra.mxu0 0
        %1218 = vmatprep.subr.bf16.mxu0 0
        %1219 = vmatpush1.bf16.msra.mxu0 0
        %1220 = vmatprep.mubr.bf16.mxu0 0
        %1221 = vmatmul.mubr.bf16.gmra.mrb[0].mxu0 %v1186
        %v1222 = vpop.f32.mrb[0].mxu0
        %v1223 = vadd.f32 0.0, %v1222
        %v1224 = vpop.f32.mrb[0].mxu0
        %v1225 = vpop.f32.mrb[0].mxu0
        %v1226 = vadd.f32 0.0, %v1225
        %v1227 = vpop.f32.mrb[0].mxu0
        %1228 = vdwg.mxu0
        %v1231 = vunpack.c.l.b16 %v1047
        %v1232 = vunpack.c.l.b16 %v1048
        %v1233 = vpack.c.b16 %v1232, %v1231
        %v1236 = vsel %vm929, %v1046, 0
        %1238 = vmatprep.subr.bf16.mxu0 0
        %1239 = vmatpush1.bf16.msra.mxu0 %v1233
        %1240 = vmatprep.subr.bf16.mxu0 0
        %1241 = vmatpush1.bf16.msra.mxu0 0
        %1242 = vmatprep.subr.bf16.mxu0 0
        %1243 = vmatpush1.bf16.msra.mxu0 0
        %1244 = vmatprep.subr.bf16.mxu0 0
        %1245 = vmatpush1.bf16.msra.mxu0 0
        %1246 = vmatprep.subr.bf16.mxu0 0
        %1247 = vmatpush1.bf16.msra.mxu0 0
        %1248 = vmatprep.subr.bf16.mxu0 0
        %1249 = vmatpush1.bf16.msra.mxu0 0
        %1250 = vmatprep.subr.bf16.mxu0 0
        %1251 = vmatpush1.bf16.msra.mxu0 0
        %1252 = vmatprep.subr.bf16.mxu0 0
        %1253 = vmatpush1.bf16.msra.mxu0 0
        %1254 = vmatprep.subr.bf16.mxu0 0
        %1255 = vmatpush1.bf16.msra.mxu0 0
        %1256 = vmatprep.subr.bf16.mxu0 0
        %1257 = vmatpush1.bf16.msra.mxu0 0
        %1258 = vmatprep.subr.bf16.mxu0 0
        %1259 = vmatpush1.bf16.msra.mxu0 0
        %1260 = vmatprep.subr.bf16.mxu0 0
        %1261 = vmatpush1.bf16.msra.mxu0 0
        %1262 = vmatprep.subr.bf16.mxu0 0
        %1263 = vmatpush1.bf16.msra.mxu0 0
        %1264 = vmatprep.subr.bf16.mxu0 0
        %1265 = vmatpush1.bf16.msra.mxu0 0
        %1266 = vmatprep.subr.bf16.mxu0 0
        %1267 = vmatpush1.bf16.msra.mxu0 0
        %1268 = vmatprep.subr.bf16.mxu0 0
        %1269 = vmatpush1.bf16.msra.mxu0 0
        %1270 = vmatprep.mubr.bf16.mxu0 0
        %1271 = vmatmul.mubr.bf16.gmra.mrb[0].mxu0 %v1236
        %v1272 = vpop.f32.mrb[0].mxu0
        %v1273 = vadd.f32 %v1223, %v1272
        %v1274 = vpop.f32.mrb[0].mxu0
        %v1275 = vpop.f32.mrb[0].mxu0
        %v1276 = vadd.f32 %v1226, %v1275
        %v1277 = vpop.f32.mrb[0].mxu0
        %1278 = vdwg.mxu0
        %1279 = vrot.lane.b32.xlu0 %v926, 96
        %v1280 = vpop.permute.xlu0 %1279
        %1281 = vrot.lane.b32.xlu0 %v927, 96
        %v1282 = vpop.permute.xlu0 %1281
        %v1284 = vsel %vm929, %v1280, 0
        %v1287 = vsel %vm929, %v1282, 0
        %1289 = vmatprep.subr.bf16.mxu0 0
        %1290 = vmatpush1.bf16.xpose.msra.mxu0 %v1287
        %1291 = vmatprep.subr.bf16.mxu0 0
        %1292 = vmatpush1.bf16.xpose.msra.mxu0 0
        %1293 = vmatprep.subr.bf16.mxu0 0
        %1294 = vmatpush1.bf16.xpose.msra.mxu0 0
        %1295 = vmatprep.subr.bf16.mxu0 0
        %1296 = vmatpush1.bf16.xpose.msra.mxu0 0
        %1297 = vmatprep.subr.bf16.mxu0 0
        %1298 = vmatpush1.bf16.xpose.msra.mxu0 0
        %1299 = vmatprep.subr.bf16.mxu0 0
        %1300 = vmatpush1.bf16.xpose.msra.mxu0 0
        %1301 = vmatprep.subr.bf16.mxu0 0
        %1302 = vmatpush1.bf16.xpose.msra.mxu0 0
        %1303 = vmatprep.subr.bf16.mxu0 0
        %1304 = vmatpush1.bf16.xpose.msra.mxu0 0
        %1305 = vmatprep.subr.bf16.mxu0 0
        %1306 = vmatpush1.bf16.xpose.msra.mxu0 0
        %1307 = vmatprep.subr.bf16.mxu0 0
        %1308 = vmatpush1.bf16.xpose.msra.mxu0 0
        %1309 = vmatprep.subr.bf16.mxu0 0
        %1310 = vmatpush1.bf16.xpose.msra.mxu0 0
        %1311 = vmatprep.subr.bf16.mxu0 0
        %1312 = vmatpush1.bf16.xpose.msra.mxu0 0
        %1313 = vmatprep.subr.bf16.mxu0 0
        %1314 = vmatpush1.bf16.xpose.msra.mxu0 0
        %1315 = vmatprep.subr.bf16.mxu0 0
        %1316 = vmatpush1.bf16.xpose.msra.mxu0 0
        %1317 = vmatprep.subr.bf16.mxu0 0
        %1318 = vmatpush1.bf16.xpose.msra.mxu0 0
        %1319 = vmatprep.subr.bf16.mxu0 0
        %1320 = vmatpush1.bf16.xpose.msra.mxu0 0
        %1321 = vmatprep.mubr.bf16.mxu0 0
        %1322 = vmatmul.mubr.bf16.gmra.mrb[0].mxu0 %v1284
        %v1323 = vpop.f32.mrb[0].mxu0
        %v1324 = vadd.f32 0.0, %v1323
        %v1325 = vpop.f32.mrb[0].mxu0
        %v1326 = vpop.f32.mrb[0].mxu0
        %v1327 = vadd.f32 0.0, %v1326
        %v1328 = vpop.f32.mrb[0].mxu0
        %1329 = vdwg.mxu0
        %v1330 = vsel %vm929, %v1324, -inf
        %1331 = vmax.xlane.f32.xlu0 %v1330
        %v1332 = vpop.xlane.xlu0 %1331
        %v1333 = vsel %vm929, %v1327, -inf
        %1334 = vmax.xlane.f32.xlu0 %v1333
        %v1335 = vpop.xlane.xlu0 %1334
        %v1336 = vsub.f32 %v1324, %v1332
        %v1337 = vsub.f32 %v1327, %v1335
        %v1338 = vmul.f32 %v1336, 1.442695
        %v1339 = vpow.pop %v1338
        %v1340 = vmul.f32 %v1337, 1.442695
        %v1341 = vpow.pop %v1340
        %v1342 = vsel %vm929, %v1339, 0.0
        %1343 = vadd.xlane.f32.xlu0 %v1342
        %v1344 = vpop.xlane.xlu0 %1343
        %v1345 = vsel %vm929, %v1341, 0.0
        %1346 = vadd.xlane.f32.xlu0 %v1345
        %v1347 = vpop.xlane.xlu0 %1346
        %v1348 = vpack.c.bf16 %v1341, %v1339
        %1349 = vrot.lane.b32.xlu0 %v928, 96
        %v1350 = vpop.permute.xlu0 %1349
        %v1353 = vsel %vm929, %v1348, 0
        %1355 = vmatprep.subr.bf16.mxu0 0
        %1356 = vmatpush1.bf16.msra.mxu0 %v1350
        %1357 = vmatprep.subr.bf16.mxu0 0
        %1358 = vmatpush1.bf16.msra.mxu0 0
        %1359 = vmatprep.subr.bf16.mxu0 0
        %1360 = vmatpush1.bf16.msra.mxu0 0
        %1361 = vmatprep.subr.bf16.mxu0 0
        %1362 = vmatpush1.bf16.msra.mxu0 0
        %1363 = vmatprep.subr.bf16.mxu0 0
        %1364 = vmatpush1.bf16.msra.mxu0 0
        %1365 = vmatprep.subr.bf16.mxu0 0
        %1366 = vmatpush1.bf16.msra.mxu0 0
        %1367 = vmatprep.subr.bf16.mxu0 0
        %1368 = vmatpush1.bf16.msra.mxu0 0
        %1369 = vmatprep.subr.bf16.mxu0 0
        %1370 = vmatpush1.bf16.msra.mxu0 0
        %1371 = vmatprep.subr.bf16.mxu0 0
        %1372 = vmatpush1.bf16.msra.mxu0 0
        %1373 = vmatprep.subr.bf16.mxu0 0
        %1374 = vmatpush1.bf16.msra.mxu0 0
        %1375 = vmatprep.subr.bf16.mxu0 0
        %1376 = vmatpush1.bf16.msra.mxu0 0
        %1377 = vmatprep.subr.bf16.mxu0 0
        %1378 = vmatpush1.bf16.msra.mxu0 0
        %1379 = vmatprep.subr.bf16.mxu0 0
        %1380 = vmatpush1.bf16.msra.mxu0 0
        %1381 = vmatprep.subr.bf16.mxu0 0
        %1382 = vmatpush1.bf16.msra.mxu0 0
        %1383 = vmatprep.subr.bf16.mxu0 0
        %1384 = vmatpush1.bf16.msra.mxu0 0
        %1385 = vmatprep.subr.bf16.mxu0 0
        %1386 = vmatpush1.bf16.msra.mxu0 0
        %1387 = vmatprep.mubr.bf16.mxu0 0
        %1388 = vmatmul.mubr.bf16.gmra.mrb[0].mxu0 %v1353
        %v1389 = vpop.f32.mrb[0].mxu0
        %v1390 = vadd.f32 0.0, %v1389
        %v1391 = vpop.f32.mrb[0].mxu0
        %v1392 = vpop.f32.mrb[0].mxu0
        %v1393 = vadd.f32 0.0, %v1392
        %v1394 = vpop.f32.mrb[0].mxu0
        %1395 = vdwg.mxu0
        %v1396 = vrcp.pop %v1344
        %v1397 = vmul.f32 1.0, %v1396
        %v1398 = vrcp.pop %v1347
        %v1399 = vmul.f32 1.0, %v1398
        %v1400 = vmul.f32 %v1390, %v1397
        %v1401 = vmul.f32 %v1393, %v1399
        %v1402 = vpack.c.bf16 %v1401, %v1400
        %s1403 = scalar_lea.vmem [#allocation10], 16
        %v1404 = vld [vmem:[%s1403] sm:$0xf]
        %v1405 = vld [vmem:[%s1403 + $0x4] sm:$0xf]
        %v1408 = vunpack.c.l.b16 %v1404
        %v1409 = vunpack.c.l.b16 %v1405
        %v1410 = vpack.c.b16 %v1409, %v1408
        %v1413 = vsel %vm929, %v1402, 0
        %1415 = vmatprep.subr.bf16.mxu0 0
        %1416 = vmatpush1.bf16.msra.mxu0 %v1410
        %1417 = vmatprep.subr.bf16.mxu0 0
        %1418 = vmatpush1.bf16.msra.mxu0 0
        %1419 = vmatprep.subr.bf16.mxu0 0
        %1420 = vmatpush1.bf16.msra.mxu0 0
        %1421 = vmatprep.subr.bf16.mxu0 0
        %1422 = vmatpush1.bf16.msra.mxu0 0
        %1423 = vmatprep.subr.bf16.mxu0 0
        %1424 = vmatpush1.bf16.msra.mxu0 0
        %1425 = vmatprep.subr.bf16.mxu0 0
        %1426 = vmatpush1.bf16.msra.mxu0 0
        %1427 = vmatprep.subr.bf16.mxu0 0
        %1428 = vmatpush1.bf16.msra.mxu0 0
        %1429 = vmatprep.subr.bf16.mxu0 0
        %1430 = vmatpush1.bf16.msra.mxu0 0
        %1431 = vmatprep.subr.bf16.mxu0 0
        %1432 = vmatpush1.bf16.msra.mxu0 0
        %1433 = vmatprep.subr.bf16.mxu0 0
        %1434 = vmatpush1.bf16.msra.mxu0 0
        %1435 = vmatprep.subr.bf16.mxu0 0
        %1436 = vmatpush1.bf16.msra.mxu0 0
        %1437 = vmatprep.subr.bf16.mxu0 0
        %1438 = vmatpush1.bf16.msra.mxu0 0
        %1439 = vmatprep.subr.bf16.mxu0 0
        %1440 = vmatpush1.bf16.msra.mxu0 0
        %1441 = vmatprep.subr.bf16.mxu0 0
        %1442 = vmatpush1.bf16.msra.mxu0 0
        %1443 = vmatprep.subr.bf16.mxu0 0
        %1444 = vmatpush1.bf16.msra.mxu0 0
        %1445 = vmatprep.subr.bf16.mxu0 0
        %1446 = vmatpush1.bf16.msra.mxu0 0
        %1447 = vmatprep.mubr.bf16.mxu0 0
        %1448 = vmatmul.mubr.bf16.gmra.mrb[0].mxu0 %v1413
        %v1449 = vpop.f32.mrb[0].mxu0
        %v1450 = vadd.f32 0.0, %v1449
        %v1451 = vpop.f32.mrb[0].mxu0
        %v1452 = vpop.f32.mrb[0].mxu0
        %v1453 = vadd.f32 0.0, %v1452
        %v1454 = vpop.f32.mrb[0].mxu0
        %1455 = vdwg.mxu0
        %v1456 = vadd.f32 %v1273, %v1450
        %v1457 = vadd.f32 %v1276, %v1453
        %1458 = vrot.lane.b32.xlu0 %v926, 80
        %v1459 = vpop.permute.xlu0 %1458
        %1460 = vrot.lane.b32.xlu0 %v927, 80
        %v1461 = vpop.permute.xlu0 %1460
        %v1463 = vsel %vm929, %v1459, 0
        %v1466 = vsel %vm929, %v1461, 0
        %1468 = vmatprep.subr.bf16.mxu0 0
        %1469 = vmatpush1.bf16.xpose.msra.mxu0 %v1466
        %1470 = vmatprep.subr.bf16.mxu0 0
        %1471 = vmatpush1.bf16.xpose.msra.mxu0 0
        %1472 = vmatprep.subr.bf16.mxu0 0
        %1473 = vmatpush1.bf16.xpose.msra.mxu0 0
        %1474 = vmatprep.subr.bf16.mxu0 0
        %1475 = vmatpush1.bf16.xpose.msra.mxu0 0
        %1476 = vmatprep.subr.bf16.mxu0 0
        %1477 = vmatpush1.bf16.xpose.msra.mxu0 0
        %1478 = vmatprep.subr.bf16.mxu0 0
        %1479 = vmatpush1.bf16.xpose.msra.mxu0 0
        %1480 = vmatprep.subr.bf16.mxu0 0
        %1481 = vmatpush1.bf16.xpose.msra.mxu0 0
        %1482 = vmatprep.subr.bf16.mxu0 0
        %1483 = vmatpush1.bf16.xpose.msra.mxu0 0
        %1484 = vmatprep.subr.bf16.mxu0 0
        %1485 = vmatpush1.bf16.xpose.msra.mxu0 0
        %1486 = vmatprep.subr.bf16.mxu0 0
        %1487 = vmatpush1.bf16.xpose.msra.mxu0 0
        %1488 = vmatprep.subr.bf16.mxu0 0
        %1489 = vmatpush1.bf16.xpose.msra.mxu0 0
        %1490 = vmatprep.subr.bf16.mxu0 0
        %1491 = vmatpush1.bf16.xpose.msra.mxu0 0
        %1492 = vmatprep.subr.bf16.mxu0 0
        %1493 = vmatpush1.bf16.xpose.msra.mxu0 0
        %1494 = vmatprep.subr.bf16.mxu0 0
        %1495 = vmatpush1.bf16.xpose.msra.mxu0 0
        %1496 = vmatprep.subr.bf16.mxu0 0
        %1497 = vmatpush1.bf16.xpose.msra.mxu0 0
        %1498 = vmatprep.subr.bf16.mxu0 0
        %1499 = vmatpush1.bf16.xpose.msra.mxu0 0
        %1500 = vmatprep.mubr.bf16.mxu0 0
        %1501 = vmatmul.mubr.bf16.gmra.mrb[0].mxu0 %v1463
        %v1502 = vpop.f32.mrb[0].mxu0
        %v1503 = vadd.f32 0.0, %v1502
        %v1504 = vpop.f32.mrb[0].mxu0
        %v1505 = vpop.f32.mrb[0].mxu0
        %v1506 = vadd.f32 0.0, %v1505
        %v1507 = vpop.f32.mrb[0].mxu0
        %1508 = vdwg.mxu0
        %v1509 = vsel %vm929, %v1503, -inf
        %1510 = vmax.xlane.f32.xlu0 %v1509
        %v1511 = vpop.xlane.xlu0 %1510
        %v1512 = vsel %vm929, %v1506, -inf
        %1513 = vmax.xlane.f32.xlu0 %v1512
        %v1514 = vpop.xlane.xlu0 %1513
        %v1515 = vsub.f32 %v1503, %v1511
        %v1516 = vsub.f32 %v1506, %v1514
        %v1517 = vmul.f32 %v1515, 1.442695
        %v1518 = vpow.pop %v1517
        %v1519 = vmul.f32 %v1516, 1.442695
        %v1520 = vpow.pop %v1519
        %v1521 = vsel %vm929, %v1518, 0.0
        %1522 = vadd.xlane.f32.xlu0 %v1521
        %v1523 = vpop.xlane.xlu0 %1522
        %v1524 = vsel %vm929, %v1520, 0.0
        %1525 = vadd.xlane.f32.xlu0 %v1524
        %v1526 = vpop.xlane.xlu0 %1525
        %v1527 = vpack.c.bf16 %v1520, %v1518
        %1528 = vrot.lane.b32.xlu0 %v928, 80
        %v1529 = vpop.permute.xlu0 %1528
        %v1532 = vsel %vm929, %v1527, 0
        %1534 = vmatprep.subr.bf16.mxu0 0
        %1535 = vmatpush1.bf16.msra.mxu0 %v1529
        %1536 = vmatprep.subr.bf16.mxu0 0
        %1537 = vmatpush1.bf16.msra.mxu0 0
        %1538 = vmatprep.subr.bf16.mxu0 0
        %1539 = vmatpush1.bf16.msra.mxu0 0
        %1540 = vmatprep.subr.bf16.mxu0 0
        %1541 = vmatpush1.bf16.msra.mxu0 0
        %1542 = vmatprep.subr.bf16.mxu0 0
        %1543 = vmatpush1.bf16.msra.mxu0 0
        %1544 = vmatprep.subr.bf16.mxu0 0
        %1545 = vmatpush1.bf16.msra.mxu0 0
        %1546 = vmatprep.subr.bf16.mxu0 0
        %1547 = vmatpush1.bf16.msra.mxu0 0
        %1548 = vmatprep.subr.bf16.mxu0 0
        %1549 = vmatpush1.bf16.msra.mxu0 0
        %1550 = vmatprep.subr.bf16.mxu0 0
        %1551 = vmatpush1.bf16.msra.mxu0 0
        %1552 = vmatprep.subr.bf16.mxu0 0
        %1553 = vmatpush1.bf16.msra.mxu0 0
        %1554 = vmatprep.subr.bf16.mxu0 0
        %1555 = vmatpush1.bf16.msra.mxu0 0
        %1556 = vmatprep.subr.bf16.mxu0 0
        %1557 = vmatpush1.bf16.msra.mxu0 0
        %1558 = vmatprep.subr.bf16.mxu0 0
        %1559 = vmatpush1.bf16.msra.mxu0 0
        %1560 = vmatprep.subr.bf16.mxu0 0
        %1561 = vmatpush1.bf16.msra.mxu0 0
        %1562 = vmatprep.subr.bf16.mxu0 0
        %1563 = vmatpush1.bf16.msra.mxu0 0
        %1564 = vmatprep.subr.bf16.mxu0 0
        %1565 = vmatpush1.bf16.msra.mxu0 0
        %1566 = vmatprep.mubr.bf16.mxu0 0
        %1567 = vmatmul.mubr.bf16.gmra.mrb[0].mxu0 %v1532
        %v1568 = vpop.f32.mrb[0].mxu0
        %v1569 = vadd.f32 0.0, %v1568
        %v1570 = vpop.f32.mrb[0].mxu0
        %v1571 = vpop.f32.mrb[0].mxu0
        %v1572 = vadd.f32 0.0, %v1571
        %v1573 = vpop.f32.mrb[0].mxu0
        %1574 = vdwg.mxu0
        %v1575 = vrcp.pop %v1523
        %v1576 = vmul.f32 1.0, %v1575
        %v1577 = vrcp.pop %v1526
        %v1578 = vmul.f32 1.0, %v1577
        %v1579 = vmul.f32 %v1569, %v1576
        %v1580 = vmul.f32 %v1572, %v1578
        %v1581 = vpack.c.bf16 %v1580, %v1579
        %s1582 = scalar_lea.vmem [#allocation10], 24
        %v1583 = vld [vmem:[%s1582] sm:$0xf]
        %v1584 = vld [vmem:[%s1582 + $0x4] sm:$0xf]
        %v1587 = vunpack.c.l.b16 %v1583
        %v1588 = vunpack.c.l.b16 %v1584
        %v1589 = vpack.c.b16 %v1588, %v1587
        %v1592 = vsel %vm929, %v1581, 0
        %1594 = vmatprep.subr.bf16.mxu0 0
        %1595 = vmatpush1.bf16.msra.mxu0 %v1589
        %1596 = vmatprep.subr.bf16.mxu0 0
        %1597 = vmatpush1.bf16.msra.mxu0 0
        %1598 = vmatprep.subr.bf16.mxu0 0
        %1599 = vmatpush1.bf16.msra.mxu0 0
        %1600 = vmatprep.subr.bf16.mxu0 0
        %1601 = vmatpush1.bf16.msra.mxu0 0
        %1602 = vmatprep.subr.bf16.mxu0 0
        %1603 = vmatpush1.bf16.msra.mxu0 0
        %1604 = vmatprep.subr.bf16.mxu0 0
        %1605 = vmatpush1.bf16.msra.mxu0 0
        %1606 = vmatprep.subr.bf16.mxu0 0
        %1607 = vmatpush1.bf16.msra.mxu0 0
        %1608 = vmatprep.subr.bf16.mxu0 0
        %1609 = vmatpush1.bf16.msra.mxu0 0
        %1610 = vmatprep.subr.bf16.mxu0 0
        %1611 = vmatpush1.bf16.msra.mxu0 0
        %1612 = vmatprep.subr.bf16.mxu0 0
        %1613 = vmatpush1.bf16.msra.mxu0 0
        %1614 = vmatprep.subr.bf16.mxu0 0
        %1615 = vmatpush1.bf16.msra.mxu0 0
        %1616 = vmatprep.subr.bf16.mxu0 0
        %1617 = vmatpush1.bf16.msra.mxu0 0
        %1618 = vmatprep.subr.bf16.mxu0 0
        %1619 = vmatpush1.bf16.msra.mxu0 0
        %1620 = vmatprep.subr.bf16.mxu0 0
        %1621 = vmatpush1.bf16.msra.mxu0 0
        %1622 = vmatprep.subr.bf16.mxu0 0
        %1623 = vmatpush1.bf16.msra.mxu0 0
        %1624 = vmatprep.subr.bf16.mxu0 0
        %1625 = vmatpush1.bf16.msra.mxu0 0
        %1626 = vmatprep.mubr.bf16.mxu0 0
        %1627 = vmatmul.mubr.bf16.gmra.mrb[0].mxu0 %v1592
        %v1628 = vpop.f32.mrb[0].mxu0
        %v1629 = vadd.f32 0.0, %v1628
        %v1630 = vpop.f32.mrb[0].mxu0
        %v1631 = vpop.f32.mrb[0].mxu0
        %v1632 = vadd.f32 0.0, %v1631
        %v1633 = vpop.f32.mrb[0].mxu0
        %1634 = vdwg.mxu0
        %v1635 = vadd.f32 %v1456, %v1629
        %v1636 = vadd.f32 %v1457, %v1632
        %v1637 = vadd.f32 %v653, %v1635
        %v1638 = vadd.f32 %v654, %v1636
        %v1639 = vld [vmem:[%s7] sm:$0x1]
        %v1641 = vlaneseq
        %v1642 = vshrl.u32 %v1641, 7
        %v1643 = vsub.s32 0, %v1642
        %v1644 = vrot.slane %v1639, %v1643
        %v1646 = vadd.f32 %v1637, %v1644
        %v1647 = vadd.f32 %v1638, %v1644
        %v1648 = vld [vmem:[%s12] sm:$0x1]
        %v1649 = vld [vmem:[%s13] sm:$0x1]
        %1650 = vadd.xlane.f32.xlu0 %v1646
        %v1651 = vpop.xlane.xlu0 %1650
        %1652 = vadd.xlane.f32.xlu0 %v1647
        %v1653 = vpop.xlane.xlu0 %1652
        %v1654 = vmul.f32 %v1651, 0.015625
        %v1655 = vmul.f32 %v1653, 0.015625
        %v1656 = vsub.f32 %v1646, %v1654
        %v1657 = vsub.f32 %v1647, %v1655
        %v1658 = vlaneseq
        %v1659 = vand.u32 %v1658, 127
        %vm1660 = vcmp.lt.s32.totalorder %v1659, 64
        %v1661 = vsel %vm1660, %v1656, 0.0
        %v1662 = vsel %vm1660, %v1657, 0.0
        %v1663 = vmul.f32 %v1661, %v1661
        %v1664 = vmul.f32 %v1662, %v1662
        %1665 = vadd.xlane.f32.xlu0 %v1663
        %v1666 = vpop.xlane.xlu0 %1665
        %1667 = vadd.xlane.f32.xlu0 %v1664
        %v1668 = vpop.xlane.xlu0 %1667
        %v1669 = vmul.f32 %v1666, 0.015625
        %v1670 = vmul.f32 %v1668, 0.015625
        %v1671 = vadd.f32 %v1669, 1e-05
        %v1672 = vadd.f32 %v1670, 1e-05
        %v1673 = vrsqrt.pop %v1671
        %v1674 = vrsqrt.pop %v1672
        %v1675 = vmul.f32 %v1661, %v1673
        %v1676 = vmul.f32 %v1662, %v1674
        %v1678 = vlaneseq
        %v1679 = vshrl.u32 %v1678, 7
        %v1680 = vsub.s32 0, %v1679
        %v1681 = vrot.slane %v1648, %v1680
        %v1683 = vmul.f32 %v1675, %v1681
        %v1684 = vmul.f32 %v1676, %v1681
        %v1686 = vlaneseq
        %v1687 = vshrl.u32 %v1686, 7
        %v1688 = vsub.s32 0, %v1687
        %v1689 = vrot.slane %v1649, %v1688
        %v1691 = vadd.f32 %v1683, %v1689
        %v1692 = vadd.f32 %v1684, %v1689
        %v1693 = vpack.c.bf16 %v1692, %v1691
        %v1694 = vld [vmem:[#allocation11] sm:$0xf]
        %v1695 = vld [vmem:[#allocation11 + $0x4] sm:$0xf]
        %v1696 = vld [vmem:[#allocation11 + $0x8] sm:$0xf]
        %v1697 = vld [vmem:[#allocation11 + $0xc] sm:$0xf]
        %v1698 = vld [vmem:[#allocation11 + $0x10] sm:$0xf]
        %v1699 = vld [vmem:[#allocation11 + $0x14] sm:$0xf]
        %v1700 = vld [vmem:[#allocation11 + $0x18] sm:$0xf]
        %v1701 = vld [vmem:[#allocation11 + $0x1c] sm:$0xf]
        %v1702 = vld [vmem:[#allocation11 + $0x20] sm:$0xf]
        %v1703 = vld [vmem:[#allocation11 + $0x24] sm:$0xf]
        %v1704 = vld [vmem:[#allocation11 + $0x28] sm:$0xf]
        %v1705 = vld [vmem:[#allocation11 + $0x2c] sm:$0xf]
        %v1706 = vld [vmem:[#allocation11 + $0x30] sm:$0xf]
        %v1707 = vld [vmem:[#allocation11 + $0x34] sm:$0xf]
        %v1708 = vld [vmem:[#allocation11 + $0x38] sm:$0xf]
        %v1709 = vld [vmem:[#allocation11 + $0x3c] sm:$0xf]
        %v1710 = vld [vmem:[%s9] sm:$0x1]
        %v1712 = vlaneseq
        %v1713 = vshrl.u32 %v1712, 7
        %v1714 = vsub.s32 0, %v1713
        %v1715 = vrot.slane %v1710, %v1714
        %v1733 = vunpack.c.l.b16 %v1694
        %v1734 = vunpack.c.l.b16 %v1695
        %v1735 = vunpack.c.l.b16 %v1696
        %v1736 = vunpack.c.l.b16 %v1697
        %v1737 = vunpack.c.l.b16 %v1698
        %v1738 = vunpack.c.l.b16 %v1699
        %v1739 = vunpack.c.l.b16 %v1700
        %v1740 = vunpack.c.l.b16 %v1701
        %v1741 = vunpack.c.l.b16 %v1702
        %v1742 = vunpack.c.l.b16 %v1703
        %v1743 = vunpack.c.l.b16 %v1704
        %v1744 = vunpack.c.l.b16 %v1705
        %v1745 = vunpack.c.l.b16 %v1706
        %v1746 = vunpack.c.l.b16 %v1707
        %v1747 = vunpack.c.l.b16 %v1708
        %v1748 = vunpack.c.l.b16 %v1709
        %v1749 = vpack.c.b16 %v1734, %v1733
        %v1750 = vpack.c.b16 %v1736, %v1735
        %v1751 = vpack.c.b16 %v1738, %v1737
        %v1752 = vpack.c.b16 %v1740, %v1739
        %v1753 = vpack.c.b16 %v1742, %v1741
        %v1754 = vpack.c.b16 %v1744, %v1743
        %v1755 = vpack.c.b16 %v1746, %v1745
        %v1756 = vpack.c.b16 %v1748, %v1747
        %1765 = vmatprep.subr.bf16.mxu0 0
        %1766 = vmatpush1.bf16.msra.mxu0 %v1749
        %1767 = vmatprep.subr.bf16.mxu0 0
        %1768 = vmatpush1.bf16.msra.mxu0 %v1750
        %1769 = vmatprep.subr.bf16.mxu0 0
        %1770 = vmatpush1.bf16.msra.mxu0 %v1751
        %1771 = vmatprep.subr.bf16.mxu0 0
        %1772 = vmatpush1.bf16.msra.mxu0 %v1752
        %1773 = vmatprep.subr.bf16.mxu0 0
        %1774 = vmatpush1.bf16.msra.mxu0 %v1753
        %1775 = vmatprep.subr.bf16.mxu0 0
        %1776 = vmatpush1.bf16.msra.mxu0 %v1754
        %1777 = vmatprep.subr.bf16.mxu0 0
        %1778 = vmatpush1.bf16.msra.mxu0 %v1755
        %1779 = vmatprep.subr.bf16.mxu0 0
        %1780 = vmatpush1.bf16.msra.mxu0 %v1756
        %1781 = vmatprep.subr.bf16.mxu0 0
        %1782 = vmatpush1.bf16.msra.mxu0 0
        %1783 = vmatprep.subr.bf16.mxu0 0
        %1784 = vmatpush1.bf16.msra.mxu0 0
        %1785 = vmatprep.subr.bf16.mxu0 0
        %1786 = vmatpush1.bf16.msra.mxu0 0
        %1787 = vmatprep.subr.bf16.mxu0 0
        %1788 = vmatpush1.bf16.msra.mxu0 0
        %1789 = vmatprep.subr.bf16.mxu0 0
        %1790 = vmatpush1.bf16.msra.mxu0 0
        %1791 = vmatprep.subr.bf16.mxu0 0
        %1792 = vmatpush1.bf16.msra.mxu0 0
        %1793 = vmatprep.subr.bf16.mxu0 0
        %1794 = vmatpush1.bf16.msra.mxu0 0
        %1795 = vmatprep.subr.bf16.mxu0 0
        %1796 = vmatpush1.bf16.msra.mxu0 0
        %1797 = vmatprep.mubr.bf16.mxu0 0
        %1798 = vmatmul.mubr.bf16.gmra.mrb[0].mxu0 %v1693
        %v1799 = vpop.f32.mrb[0].mxu0
        %v1800 = vadd.f32 %v1715, %v1799
        %v1801 = vpop.f32.mrb[0].mxu0
        %v1802 = vpop.f32.mrb[0].mxu0
        %v1803 = vadd.f32 %v1715, %v1802
        %v1804 = vpop.f32.mrb[0].mxu0
        %1805 = vdwg.mxu0
        %v1806 = vmax.f32 %v1800, 0.0
        %v1807 = vmax.f32 %v1803, 0.0
        %v1808 = vpack.c.bf16 %v1807, %v1806
        %v1809 = vld [vmem:[#allocation13] sm:$0xf]
        %v1810 = vld [vmem:[#allocation13 + $0x4] sm:$0xf]
        %v1811 = vld [vmem:[#allocation13 + $0x8] sm:$0xf]
        %v1812 = vld [vmem:[#allocation13 + $0xc] sm:$0xf]
        %v1813 = vld [vmem:[#allocation13 + $0x10] sm:$0xf]
        %v1814 = vld [vmem:[#allocation13 + $0x14] sm:$0xf]
        %v1815 = vld [vmem:[#allocation13 + $0x18] sm:$0xf]
        %v1816 = vld [vmem:[#allocation13 + $0x1c] sm:$0xf]
        %v1817 = vld [vmem:[#allocation13 + $0x20] sm:$0xf]
        %v1818 = vld [vmem:[#allocation13 + $0x24] sm:$0xf]
        %v1819 = vld [vmem:[#allocation13 + $0x28] sm:$0xf]
        %v1820 = vld [vmem:[#allocation13 + $0x2c] sm:$0xf]
        %v1821 = vld [vmem:[#allocation13 + $0x30] sm:$0xf]
        %v1822 = vld [vmem:[#allocation13 + $0x34] sm:$0xf]
        %v1823 = vld [vmem:[#allocation13 + $0x38] sm:$0xf]
        %v1824 = vld [vmem:[#allocation13 + $0x3c] sm:$0xf]
        %v1825 = vld [vmem:[%s11] sm:$0x1]
        %v1827 = vlaneseq
        %v1828 = vshrl.u32 %v1827, 7
        %v1829 = vsub.s32 0, %v1828
        %v1830 = vrot.slane %v1825, %v1829
        %v1848 = vunpack.c.l.b16 %v1809
        %v1849 = vunpack.c.l.b16 %v1810
        %v1850 = vunpack.c.l.b16 %v1811
        %v1851 = vunpack.c.l.b16 %v1812
        %v1852 = vunpack.c.l.b16 %v1813
        %v1853 = vunpack.c.l.b16 %v1814
        %v1854 = vunpack.c.l.b16 %v1815
        %v1855 = vunpack.c.l.b16 %v1816
        %v1856 = vunpack.c.l.b16 %v1817
        %v1857 = vunpack.c.l.b16 %v1818
        %v1858 = vunpack.c.l.b16 %v1819
        %v1859 = vunpack.c.l.b16 %v1820
        %v1860 = vunpack.c.l.b16 %v1821
        %v1861 = vunpack.c.l.b16 %v1822
        %v1862 = vunpack.c.l.b16 %v1823
        %v1863 = vunpack.c.l.b16 %v1824
        %v1864 = vpack.c.b16 %v1849, %v1848
        %v1865 = vpack.c.b16 %v1851, %v1850
        %v1866 = vpack.c.b16 %v1853, %v1852
        %v1867 = vpack.c.b16 %v1855, %v1854
        %v1868 = vpack.c.b16 %v1857, %v1856
        %v1869 = vpack.c.b16 %v1859, %v1858
        %v1870 = vpack.c.b16 %v1861, %v1860
        %v1871 = vpack.c.b16 %v1863, %v1862
        %1880 = vmatprep.subr.bf16.mxu0 0
        %1881 = vmatpush1.bf16.msra.mxu0 %v1864
        %1882 = vmatprep.subr.bf16.mxu0 0
        %1883 = vmatpush1.bf16.msra.mxu0 %v1865
        %1884 = vmatprep.subr.bf16.mxu0 0
        %1885 = vmatpush1.bf16.msra.mxu0 %v1866
        %1886 = vmatprep.subr.bf16.mxu0 0
        %1887 = vmatpush1.bf16.msra.mxu0 %v1867
        %1888 = vmatprep.subr.bf16.mxu0 0
        %1889 = vmatpush1.bf16.msra.mxu0 %v1868
        %1890 = vmatprep.subr.bf16.mxu0 0
        %1891 = vmatpush1.bf16.msra.mxu0 %v1869
        %1892 = vmatprep.subr.bf16.mxu0 0
        %1893 = vmatpush1.bf16.msra.mxu0 %v1870
        %1894 = vmatprep.subr.bf16.mxu0 0
        %1895 = vmatpush1.bf16.msra.mxu0 %v1871
        %1896 = vmatprep.subr.bf16.mxu0 0
        %1897 = vmatpush1.bf16.msra.mxu0 0
        %1898 = vmatprep.subr.bf16.mxu0 0
        %1899 = vmatpush1.bf16.msra.mxu0 0
        %1900 = vmatprep.subr.bf16.mxu0 0
        %1901 = vmatpush1.bf16.msra.mxu0 0
        %1902 = vmatprep.subr.bf16.mxu0 0
        %1903 = vmatpush1.bf16.msra.mxu0 0
        %1904 = vmatprep.subr.bf16.mxu0 0
        %1905 = vmatpush1.bf16.msra.mxu0 0
        %1906 = vmatprep.subr.bf16.mxu0 0
        %1907 = vmatpush1.bf16.msra.mxu0 0
        %1908 = vmatprep.subr.bf16.mxu0 0
        %1909 = vmatpush1.bf16.msra.mxu0 0
        %1910 = vmatprep.subr.bf16.mxu0 0
        %1911 = vmatpush1.bf16.msra.mxu0 0
        %1912 = vmatprep.mubr.bf16.mxu0 0
        %1913 = vmatmul.mubr.bf16.gmra.mrb[0].mxu0 %v1808
        %v1914 = vpop.f32.mrb[0].mxu0
        %v1915 = vadd.f32 %v1830, %v1914
        %v1916 = vpop.f32.mrb[0].mxu0
        %v1917 = vpop.f32.mrb[0].mxu0
        %v1918 = vadd.f32 %v1830, %v1917
        %v1919 = vpop.f32.mrb[0].mxu0
        %1920 = vdwg.mxu0
        %v1921 = vadd.f32 %v1691, %v1915
        %v1922 = vadd.f32 %v1692, %v1918
        %v1923 = vld [vmem:[%s14] sm:$0x1]
        %v1924 = vld [vmem:[%s15] sm:$0x1]
        %1925 = vadd.xlane.f32.xlu0 %v1921
        %v1926 = vpop.xlane.xlu0 %1925
        %1927 = vadd.xlane.f32.xlu0 %v1922
        %v1928 = vpop.xlane.xlu0 %1927
        %v1929 = vmul.f32 %v1926, 0.015625
        %v1930 = vmul.f32 %v1928, 0.015625
        %v1931 = vsub.f32 %v1921, %v1929
        %v1932 = vsub.f32 %v1922, %v1930
        %v1933 = vsel %vm1660, %v1931, 0.0
        %v1934 = vsel %vm1660, %v1932, 0.0
        %v1935 = vmul.f32 %v1933, %v1933
        %v1936 = vmul.f32 %v1934, %v1934
        %1937 = vadd.xlane.f32.xlu0 %v1935
        %v1938 = vpop.xlane.xlu0 %1937
        %1939 = vadd.xlane.f32.xlu0 %v1936
        %v1940 = vpop.xlane.xlu0 %1939
        %v1941 = vmul.f32 %v1938, 0.015625
        %v1942 = vmul.f32 %v1940, 0.015625
        %v1943 = vadd.f32 %v1941, 1e-05
        %v1944 = vadd.f32 %v1942, 1e-05
        %v1945 = vrsqrt.pop %v1943
        %v1946 = vrsqrt.pop %v1944
        %v1947 = vmul.f32 %v1933, %v1945
        %v1948 = vmul.f32 %v1934, %v1946
        %v1950 = vlaneseq
        %v1951 = vshrl.u32 %v1950, 7
        %v1952 = vsub.s32 0, %v1951
        %v1953 = vrot.slane %v1923, %v1952
        %v1955 = vmul.f32 %v1947, %v1953
        %v1956 = vmul.f32 %v1948, %v1953
        %v1958 = vlaneseq
        %v1959 = vshrl.u32 %v1958, 7
        %v1960 = vsub.s32 0, %v1959
        %v1961 = vrot.slane %v1924, %v1960
        %v1963 = vadd.f32 %v1955, %v1961
        %v1964 = vadd.f32 %v1956, %v1961
        %1965 = vst [vmem:[%s651] sm:$0xff] %v1963
        %1966 = vst [vmem:[%s651 + $0x8] sm:$0xff] %v1964
        %s1967 = sand.u32 %s392, 1
        %s1968 = scalar_lea.sflag [#allocation4], %s1967
        %s1969 = sand.u32 %s392, 1
        %s1970 = smul.addr %s1969, 16
        %s1971 = scalar_lea.vmem [#allocation14], %s1970
        // Predicated region
        $region113: #{tpu_custom_call.1} parent=83 // pred_check
          %p1972 = pneg %p402
        $region114: #{tpu_custom_call.1} parent=83 // pred_check_branch
          %1974 = sbr.rel (%p1972) target = $region116
        $region115: #{tpu_custom_call.1} parent=83 // pred_region
          %s1976 = ssub.s32 256, 256
          %1977 = vsyncadd %s1968, %s1976
          %s1978 = smul.addr %s38, 2
          %s1979 = smul.addr %s1978, 128
          %s1980 = scalar_lea.hbm %s16, %s1979
          %s1981 = sshll.u32 %s1971, 4
          %s1982 = int_to_ptr.vmem [resolvable:$true] %s1981
          %1987 = dma.vmem_to_hbm [thread:$0]  %s1982, 256, %s1980, %s1968, 128, 128, 8
        $region116: #{tpu_custom_call.1} parent=83 // pred_fallthru
          _
      $region84: #{tpu_custom_call.1} parent=5 // pred_fallthru
        _
      %p1988 = scmp.le.s32.totalorder 2, %s33
      // Predicated region
      $region117: #{tpu_custom_call.1} parent=5 // pred_check
        %p1989 = pneg %p1988
      $region118: #{tpu_custom_call.1} parent=5 // pred_check_branch
        %1991 = sbr.rel (%p1989) target = $region120
      $region119: #{tpu_custom_call.1} parent=5 // pred_region
        %s1992 = ssub.s32 %s33, 2
        // Predicated region
        $region121: #{tpu_custom_call.1} parent=119 // pred_check
          %p1993 = pneg %p408
        $region122: #{tpu_custom_call.1} parent=119 // pred_check_branch
          %1995 = sbr.rel (%p1993) target = $region124
        $region123: #{tpu_custom_call.1} parent=119 // pred_region
          %s1996 = sand.u32 %s393, 1
          %s1997 = scalar_lea.sflag [#allocation4], %s1996
          %s1998 = sand.u32 %s393, 1
          %s1999 = smul.addr %s1998, 16
          %s2000 = scalar_lea.vmem [#allocation14], %s1999
          %2001 = dma.done %s1997, 256
        $region124: #{tpu_custom_call.1} parent=119 // pred_fallthru
          _
      $region120: #{tpu_custom_call.1} parent=5 // pred_fallthru
        _
    $region6: #{tpu_custom_call.1} parent=1 // loop_footer
      %s37 = sadd.s32 1, %s33
    $region7: #{tpu_custom_call.1} parent=1 // loop_footer_branch
      %32 = sbr.rel target = $region3
    $region8: #{tpu_custom_call.1} parent=1 // loop_exit
      _
    %2002 = vsyncpa [#allocation3], 1
    %s2003 = scalar_lea.sflag [#allocation3], 1
    %2004 = vsyncpa %s2003, 1
    %2005 = vsyncpa [#allocation6], 1
    %s2006 = scalar_lea.sflag [#allocation6], 1
    %2007 = vsyncpa %s2006, 1
    %2008 = vsyncpa [#allocation9], 1
    %2009 = vsyncpa [#allocation12], 1
    %2010 = vsyncpa [#allocation4], 1
    %s2011 = scalar_lea.sflag [#allocation4], 1
    %2012 = vsyncpa %s2011, 1

</llo_original>
